<compile_context>
chip_gen: v5e
topology: v5e:2x2
jax: 0.10.0
libtpu: 0.0.40
codegen_flags: <defaults>
</compile_context>

<pallas_src>
import functools

import jax
import jax.numpy as jnp
from jax import lax
from jax.experimental import pallas as pl
from jax.experimental.pallas import tpu as pltpu


def _block_kernel(x_ref, g1_ref, be1_ref, wq_ref, wk_ref, wv_ref, wo_ref, bo_ref,
                  g2_ref, be2_ref, w1_ref, bf1_ref, w2_ref, bf2_ref,
                  o_ref,
                  normed_ref, acc_ref,
                  *, eps):
    h = pl.program_id(1)
    last = pl.num_programs(1) - 1

    def layer_norm(y, g, b):
        mu = jnp.mean(y, axis=-1, keepdims=True)
        yc = y - mu
        var = jnp.mean(yc * yc, axis=-1, keepdims=True)
        return yc * lax.rsqrt(var + eps) * g + b

    # ---- per-batch init: runs once, at the first head step ------------------
    @pl.when(h == 0)
    def _():
        x = x_ref[0]                                              # (N, C) f32
        n1 = layer_norm(x, g1_ref[...], be1_ref[...])
        normed_ref[...] = n1.astype(normed_ref.dtype)             # bf16 MXU operand
        acc_ref[...] = x                                          # residual lives in acc

    # ---- one attention head per grid step (head split done at DMA time) -----
    nb = normed_ref[...]                                          # (N, C) bf16
    q = jnp.dot(nb, wq_ref[0], preferred_element_type=jnp.float32)  # (N, hd); scale folded into wq
    k = jnp.dot(nb, wk_ref[0], preferred_element_type=jnp.float32)
    v = jnp.dot(nb, wv_ref[0], preferred_element_type=jnp.float32)

    s = lax.dot_general(q.astype(jnp.bfloat16), k.astype(jnp.bfloat16),
                        (((1,), (1,)), ((), ())),
                        preferred_element_type=jnp.float32)       # (N, N), q @ k^T
    s = s - jnp.max(s, axis=-1, keepdims=True)
    p = jnp.exp(s)
    p = p * pl.reciprocal(jnp.sum(p, axis=-1, keepdims=True), approx=True)
    ctx = jnp.dot(p.astype(jnp.bfloat16), v.astype(jnp.bfloat16),
                  preferred_element_type=jnp.float32)             # (N, hd)
    # accumulate this head's slice of the output projection (no concat needed)
    acc_ref[...] += jnp.dot(ctx.astype(jnp.bfloat16), wo_ref[0],
                            preferred_element_type=jnp.float32)   # (N, C)

    # ---- finalize: proj bias, LN2 -> MLP -> residual, single output write ----
    @pl.when(h == last)
    def _():
        x1 = acc_ref[...] + bo_ref[...]                           # x + attn(norm1(x))
        n2 = layer_norm(x1, g2_ref[...], be2_ref[...])
        mid = jnp.dot(n2.astype(jnp.bfloat16), w1_ref[...],
                      preferred_element_type=jnp.float32) + bf1_ref[...]
        # tanh-approx GELU (PyTorch nn.GELU is erf-exact; |diff| < ~1e-3)
        c0 = 0.7978845608028654  # sqrt(2/pi)
        act = 0.5 * mid * (1.0 + jnp.tanh(c0 * (mid + 0.044715 * mid * mid * mid)))
        mlp = jnp.dot(act.astype(jnp.bfloat16), w2_ref[...],
                      preferred_element_type=jnp.float32) + bf2_ref[...]
        o_ref[0] = (x1 + mlp).astype(o_ref.dtype)


def block_pallas(x, wqkv, wproj, bproj, gamma1, beta1, gamma2, beta2,
                 wfc1, bfc1, wfc2, bfc2, *, num_heads, eps=1e-5):
    B, N, C = x.shape
    hd = C // num_heads
    M = wfc1.shape[1]
    scale = hd ** (-0.5)

    # ---- one-time parameter re-layout / casts (outside the kernel) ----------
    # qkv weight (C, 3C) -> per-head (H, C, hd) slabs so the head split happens
    # via BlockSpec index_map instead of in-kernel lane extracts.
    w3 = wqkv.reshape(C, 3, num_heads, hd)
    wq = (jnp.transpose(w3[:, 0], (1, 0, 2)) * scale).astype(jnp.bfloat16)  # scale folded in
    wk = jnp.transpose(w3[:, 1], (1, 0, 2)).astype(jnp.bfloat16)
    wv = jnp.transpose(w3[:, 2], (1, 0, 2)).astype(jnp.bfloat16)
    wo = wproj.reshape(num_heads, hd, C).astype(jnp.bfloat16)               # row-groups per head
    w1b = wfc1.astype(jnp.bfloat16)
    w2b = wfc2.astype(jnp.bfloat16)

    g1 = gamma1.reshape(1, C).astype(jnp.float32)
    b1 = beta1.reshape(1, C).astype(jnp.float32)
    g2 = gamma2.reshape(1, C).astype(jnp.float32)
    b2 = beta2.reshape(1, C).astype(jnp.float32)
    bo = bproj.reshape(1, C).astype(jnp.float32)
    bm1 = bfc1.reshape(1, M).astype(jnp.float32)
    bm2 = bfc2.reshape(1, C).astype(jnp.float32)

    kernel = functools.partial(_block_kernel, eps=eps)

    const2 = lambda b, h: (0, 0)
    head3 = lambda b, h: (h, 0, 0)
    batch3 = lambda b, h: (b, 0, 0)

    return pl.pallas_call(
        kernel,
        out_shape=jax.ShapeDtypeStruct((B, N, C), x.dtype),
        grid_spec=pltpu.PrefetchScalarGridSpec(
            num_scalar_prefetch=0,
            grid=(B, num_heads),
            in_specs=[
                pl.BlockSpec((1, N, C), batch3),      # x
                pl.BlockSpec((1, C), const2),         # gamma1
                pl.BlockSpec((1, C), const2),         # beta1
                pl.BlockSpec((1, C, hd), head3),      # Wq (scaled), this head
                pl.BlockSpec((1, C, hd), head3),      # Wk, this head
                pl.BlockSpec((1, C, hd), head3),      # Wv, this head
                pl.BlockSpec((1, hd, C), head3),      # Wproj rows for this head
                pl.BlockSpec((1, C), const2),         # bproj
                pl.BlockSpec((1, C), const2),         # gamma2
                pl.BlockSpec((1, C), const2),         # beta2
                pl.BlockSpec((C, M), const2),         # W_fc1
                pl.BlockSpec((1, M), const2),         # b_fc1
                pl.BlockSpec((M, C), const2),         # W_fc2
                pl.BlockSpec((1, C), const2),         # b_fc2
            ],
            out_specs=pl.BlockSpec((1, N, C), batch3),
            scratch_shapes=[
                pltpu.VMEM((N, C), jnp.bfloat16),     # norm1(x) as bf16 MXU operand
                pltpu.VMEM((N, C), jnp.float32),      # residual + attention accumulator
            ],
        ),
        compiler_params=pltpu.CompilerParams(
            dimension_semantics=("parallel", "arbitrary")),
    )(x, g1, b1, wq, wk, wv, wo, bo, g2, b2, w1b, bm1, w2b, bm2)


def block_reference(x, wqkv, wproj, bproj, gamma1, beta1, gamma2, beta2,
                    wfc1, bfc1, wfc2, bfc2, *, num_heads, eps=1e-5):
    """Pure-JAX f32 reference matching the PyTorch Block.forward exactly."""
    B, N, C = x.shape
    hd = C // num_heads
    scale = hd ** (-0.5)

    def ln(y, g, b):
        mu = y.mean(-1, keepdims=True)
        var = ((y - mu) ** 2).mean(-1, keepdims=True)
        return (y - mu) / jnp.sqrt(var + eps) * g + b

    h1 = ln(x, gamma1, beta1)
    qkv = jnp.einsum('bnc,cd->bnd', h1, wqkv)
    qkv = qkv.reshape(B, N, 3, num_heads, hd).transpose(2, 0, 3, 1, 4)
    q, k, v = qkv[0], qkv[1], qkv[2]                              # (B, H, N, hd)
    attn = jnp.einsum('bhnd,bhmd->bhnm', q, k) * scale
    attn = jax.nn.softmax(attn, axis=-1)
    ctx = jnp.einsum('bhnm,bhmd->bhnd', attn, v)
    ctx = ctx.transpose(0, 2, 1, 3).reshape(B, N, C)
    x1 = x + jnp.einsum('bnc,cd->bnd', ctx, wproj) + bproj
    h2 = ln(x1, gamma2, beta2)
    mid = jnp.einsum('bnc,cm->bnm', h2, wfc1) + bfc1
    mid = jax.nn.gelu(mid, approximate=False)                     # nn.GELU (exact)
    return x1 + jnp.einsum('bnm,mc->bnc', mid, wfc2) + bfc2


if __name__ == "__main__":
    B, N, C = 2, 16, 64          # tokens (B, N, C); dim divisible by num_heads
    num_heads = 8
    mlp_hidden = 4 * C           # mlp_ratio = 4.0

    key = jax.random.PRNGKey(0)
    ks = jax.random.split(key, 12)
    x = jax.random.normal(ks[0], (B, N, C), dtype=jnp.float32)

    # nn.Linear weights stored as (in_features, out_features): y = x @ W [+ b]
    wqkv = jax.random.normal(ks[1], (C, 3 * C), jnp.float32) * 0.05   # qkv_bias=False
    wproj = jax.random.normal(ks[2], (C, C), jnp.float32) * 0.05
    bproj = jax.random.normal(ks[3], (C,), jnp.float32) * 0.05
    gamma1 = 1.0 + 0.1 * jax.random.normal(ks[4], (C,), jnp.float32)
    beta1 = 0.1 * jax.random.normal(ks[5], (C,), jnp.float32)
    gamma2 = 1.0 + 0.1 * jax.random.normal(ks[6], (C,), jnp.float32)
    beta2 = 0.1 * jax.random.normal(ks[7], (C,), jnp.float32)
    wfc1 = jax.random.normal(ks[8], (C, mlp_hidden), jnp.float32) * 0.05
    bfc1 = jax.random.normal(ks[9], (mlp_hidden,), jnp.float32) * 0.05
    wfc2 = jax.random.normal(ks[10], (mlp_hidden, C), jnp.float32) * 0.05
    bfc2 = jax.random.normal(ks[11], (C,), jnp.float32) * 0.05

    out = block_pallas(x, wqkv, wproj, bproj, gamma1, beta1, gamma2, beta2,
                       wfc1, bfc1, wfc2, bfc2, num_heads=num_heads)
    out = jax.block_until_ready(out)

    ref = block_reference(x, wqkv, wproj, bproj, gamma1, beta1, gamma2, beta2,
                          wfc1, bfc1, wfc2, bfc2, num_heads=num_heads)

    assert out.shape == (B, N, C)
    # bf16 MXU operands + approx reciprocal + tanh-GELU vs. exact f32 reference
    assert jnp.allclose(out, ref, atol=2e-2, rtol=2e-2), (
        f"max abs diff {jnp.max(jnp.abs(out - ref))}")

    print("KERNEL_OK")
</pallas_src>

<mosaic_0001>
module attributes {stable_mosaic.version = 11 : i64} {
  func.func @_block_kernel(%arg0: i32, %arg1: i32, %arg2: memref<1x16x64xf32, #tpu.memory_space<vmem>>, %arg3: memref<1x64xf32, #tpu.memory_space<vmem>>, %arg4: memref<1x64xf32, #tpu.memory_space<vmem>>, %arg5: memref<1x64x8xbf16, #tpu.memory_space<vmem>>, %arg6: memref<1x64x8xbf16, #tpu.memory_space<vmem>>, %arg7: memref<1x64x8xbf16, #tpu.memory_space<vmem>>, %arg8: memref<1x8x64xbf16, #tpu.memory_space<vmem>>, %arg9: memref<1x64xf32, #tpu.memory_space<vmem>>, %arg10: memref<1x64xf32, #tpu.memory_space<vmem>>, %arg11: memref<1x64xf32, #tpu.memory_space<vmem>>, %arg12: memref<64x256xbf16, #tpu.memory_space<vmem>>, %arg13: memref<1x256xf32, #tpu.memory_space<vmem>>, %arg14: memref<256x64xbf16, #tpu.memory_space<vmem>>, %arg15: memref<1x64xf32, #tpu.memory_space<vmem>>, %arg16: memref<1x16x64xf32, #tpu.memory_space<vmem>>, %arg17: memref<16x64xbf16, #tpu.memory_space<vmem>>, %arg18: memref<16x64xf32, #tpu.memory_space<vmem>>) attributes {dimension_semantics = [#tpu.dimension_semantics<parallel>, #tpu.dimension_semantics<arbitrary>], iteration_bounds = array<i64: 2, 8>, scalar_prefetch = 0 : i64, scratch_operands = 2 : i64, tpu.core_type = #tpu.core_type<tc>, window_params = [{transform_indices = @transform_0, window_bounds = array<i64: 1, 16, 64>}, {pipeline_mode = #tpu.pipeline_mode<synchronous>, transform_indices = @transform_1, window_bounds = array<i64: 1, 64>}, {pipeline_mode = #tpu.pipeline_mode<synchronous>, transform_indices = @transform_2, window_bounds = array<i64: 1, 64>}, {transform_indices = @transform_3, window_bounds = array<i64: 1, 64, 8>}, {transform_indices = @transform_4, window_bounds = array<i64: 1, 64, 8>}, {transform_indices = @transform_5, window_bounds = array<i64: 1, 64, 8>}, {transform_indices = @transform_6, window_bounds = array<i64: 1, 8, 64>}, {pipeline_mode = #tpu.pipeline_mode<synchronous>, transform_indices = @transform_7, window_bounds = array<i64: 1, 64>}, {pipeline_mode = #tpu.pipeline_mode<synchronous>, transform_indices = @transform_8, window_bounds = array<i64: 1, 64>}, {pipeline_mode = #tpu.pipeline_mode<synchronous>, transform_indices = @transform_9, window_bounds = array<i64: 1, 64>}, {pipeline_mode = #tpu.pipeline_mode<synchronous>, transform_indices = @transform_10, window_bounds = array<i64: 64, 256>}, {pipeline_mode = #tpu.pipeline_mode<synchronous>, transform_indices = @transform_11, window_bounds = array<i64: 1, 256>}, {pipeline_mode = #tpu.pipeline_mode<synchronous>, transform_indices = @transform_12, window_bounds = array<i64: 256, 64>}, {pipeline_mode = #tpu.pipeline_mode<synchronous>, transform_indices = @transform_13, window_bounds = array<i64: 1, 64>}, {transform_indices = @transform_14, window_bounds = array<i64: 1, 16, 64>}]} {
    %c0_i32 = arith.constant 0 : i32
    %0 = arith.cmpi eq, %arg1, %c0_i32 : i32
    %1 = arith.extui %0 : i1 to i32
    %c0_i32_0 = arith.constant 0 : i32
    %2 = arith.cmpi ne, %1, %c0_i32_0 : i32
    scf.if %2 {
      %c0_26 = arith.constant 0 : index
      %c0_27 = arith.constant 0 : index
      %c0_28 = arith.constant 0 : index
      %39 = vector.load %arg2[%c0_26, %c0_27, %c0_28] : memref<1x16x64xf32, #tpu.memory_space<vmem>>, vector<1x16x64xf32>
      %40 = vector.shape_cast %39 : vector<1x16x64xf32> to vector<16x64xf32>
      %c0_29 = arith.constant 0 : index
      %c0_30 = arith.constant 0 : index
      %41 = vector.load %arg3[%c0_29, %c0_30] : memref<1x64xf32, #tpu.memory_space<vmem>>, vector<1x64xf32>
      %c0_31 = arith.constant 0 : index
      %c0_32 = arith.constant 0 : index
      %42 = vector.load %arg4[%c0_31, %c0_32] : memref<1x64xf32, #tpu.memory_space<vmem>>, vector<1x64xf32>
      %cst_33 = arith.constant dense<0.000000e+00> : vector<16xf32>
      %43 = vector.multi_reduction <add>, %40, %cst_33 [1] : vector<16x64xf32> to vector<16xf32>
      %44 = vector.shape_cast %43 : vector<16xf32> to vector<16x1xf32>
      %cst_34 = arith.constant 6.400000e+01 : f32
      %45 = vector.broadcast %cst_34 : f32 to vector<16x1xf32>
      %46 = arith.divf %44, %45 : vector<16x1xf32>
      %47 = vector.broadcast %46 : vector<16x1xf32> to vector<16x64xf32>
      %48 = arith.subf %40, %47 : vector<16x64xf32>
      %49 = arith.mulf %48, %48 : vector<16x64xf32>
      %cst_35 = arith.constant dense<0.000000e+00> : vector<16xf32>
      %50 = vector.multi_reduction <add>, %49, %cst_35 [1] : vector<16x64xf32> to vector<16xf32>
      %51 = vector.shape_cast %50 : vector<16xf32> to vector<16x1xf32>
      %cst_36 = arith.constant 6.400000e+01 : f32
      %52 = vector.broadcast %cst_36 : f32 to vector<16x1xf32>
      %53 = arith.divf %51, %52 : vector<16x1xf32>
      %cst_37 = arith.constant 9.99999974E-6 : f32
      %54 = vector.broadcast %cst_37 : f32 to vector<16x1xf32>
      %55 = arith.addf %53, %54 : vector<16x1xf32>
      %56 = math.rsqrt %55 : vector<16x1xf32>
      %57 = vector.broadcast %56 : vector<16x1xf32> to vector<16x64xf32>
      %58 = arith.mulf %48, %57 : vector<16x64xf32>
      %59 = vector.broadcast %41 : vector<1x64xf32> to vector<16x64xf32>
      %60 = arith.mulf %58, %59 : vector<16x64xf32>
      %61 = vector.broadcast %42 : vector<1x64xf32> to vector<16x64xf32>
      %62 = arith.addf %60, %61 : vector<16x64xf32>
      %63 = arith.truncf %62 : vector<16x64xf32> to vector<16x64xbf16>
      %c0_38 = arith.constant 0 : index
      %c0_39 = arith.constant 0 : index
      %64 = vector.load %arg17[%c0_38, %c0_39] : memref<16x64xbf16, #tpu.memory_space<vmem>>, vector<16x64xbf16>
      tpu.vector_store %arg17[%c0_38, %c0_39], %63 {strides = array<i32>} : memref<16x64xbf16, #tpu.memory_space<vmem>>, vector<16x64xbf16>,
      %c0_40 = arith.constant 0 : index
      %c0_41 = arith.constant 0 : index
      %65 = vector.load %arg18[%c0_40, %c0_41] : memref<16x64xf32, #tpu.memory_space<vmem>>, vector<16x64xf32>
      tpu.vector_store %arg18[%c0_40, %c0_41], %40 {strides = array<i32>} : memref<16x64xf32, #tpu.memory_space<vmem>>, vector<16x64xf32>,
    } else {
    }
    %c0 = arith.constant 0 : index
    %c0_1 = arith.constant 0 : index
    %3 = vector.load %arg17[%c0, %c0_1] : memref<16x64xbf16, #tpu.memory_space<vmem>>, vector<16x64xbf16>
    %c0_2 = arith.constant 0 : index
    %c0_3 = arith.constant 0 : index
    %c0_4 = arith.constant 0 : index
    %4 = vector.load %arg5[%c0_2, %c0_3, %c0_4] : memref<1x64x8xbf16, #tpu.memory_space<vmem>>, vector<1x64x8xbf16>
    %5 = vector.shape_cast %4 : vector<1x64x8xbf16> to vector<64x8xbf16>
    %cst = arith.constant dense<0.000000e+00> : vector<16x8xf32>
    %6 = tpu.matmul %3, %5, %cst {dimension_numbers = #tpu.dot_dimension_numbers<[1], [0], [0], [1], [0, 0, 1, 1], [], []>} : vector<16x64xbf16>, vector<64x8xbf16>, vector<16x8xf32> -> vector<16x8xf32>
    %c0_5 = arith.constant 0 : index
    %c0_6 = arith.constant 0 : index
    %c0_7 = arith.constant 0 : index
    %7 = vector.load %arg6[%c0_5, %c0_6, %c0_7] : memref<1x64x8xbf16, #tpu.memory_space<vmem>>, vector<1x64x8xbf16>
    %8 = vector.shape_cast %7 : vector<1x64x8xbf16> to vector<64x8xbf16>
    %cst_8 = arith.constant dense<0.000000e+00> : vector<16x8xf32>
    %9 = tpu.matmul %3, %8, %cst_8 {dimension_numbers = #tpu.dot_dimension_numbers<[1], [0], [0], [1], [0, 0, 1, 1], [], []>} : vector<16x64xbf16>, vector<64x8xbf16>, vector<16x8xf32> -> vector<16x8xf32>
    %c0_9 = arith.constant 0 : index
    %c0_10 = arith.constant 0 : index
    %c0_11 = arith.constant 0 : index
    %10 = vector.load %arg7[%c0_9, %c0_10, %c0_11] : memref<1x64x8xbf16, #tpu.memory_space<vmem>>, vector<1x64x8xbf16>
    %11 = vector.shape_cast %10 : vector<1x64x8xbf16> to vector<64x8xbf16>
    %cst_12 = arith.constant dense<0.000000e+00> : vector<16x8xf32>
    %12 = tpu.matmul %3, %11, %cst_12 {dimension_numbers = #tpu.dot_dimension_numbers<[1], [0], [0], [1], [0, 0, 1, 1], [], []>} : vector<16x64xbf16>, vector<64x8xbf16>, vector<16x8xf32> -> vector<16x8xf32>
    %13 = arith.truncf %6 : vector<16x8xf32> to vector<16x8xbf16>
    %14 = arith.truncf %9 : vector<16x8xf32> to vector<16x8xbf16>
    %cst_13 = arith.constant dense<0.000000e+00> : vector<16x16xf32>
    %15 = tpu.matmul %13, %14, %cst_13 {dimension_numbers = #tpu.dot_dimension_numbers<[1], [1], [0], [0], [0, 0, 1, 0], [], []>} : vector<16x8xbf16>, vector<16x8xbf16>, vector<16x16xf32> -> vector<16x16xf32>
    %cst_14 = arith.constant dense<0xFF800000> : vector<16xf32>
    %16 = vector.multi_reduction <maximumf>, %15, %cst_14 [1] : vector<16x16xf32> to vector<16xf32>
    %17 = vector.shape_cast %16 : vector<16xf32> to vector<16x1xf32>
    %18 = vector.broadcast %17 : vector<16x1xf32> to vector<16x16xf32>
    %19 = arith.subf %15, %18 : vector<16x16xf32>
    %20 = math.exp %19 : vector<16x16xf32>
    %cst_15 = arith.constant dense<0.000000e+00> : vector<16xf32>
    %21 = vector.multi_reduction <add>, %20, %cst_15 [1] : vector<16x16xf32> to vector<16xf32>
    %22 = vector.shape_cast %21 : vector<16xf32> to vector<16x1xf32>
    %23 = tpu.reciprocal %22 {approx = true} : vector<16x1xf32> -> vector<16x1xf32>
    %24 = vector.broadcast %23 : vector<16x1xf32> to vector<16x16xf32>
    %25 = arith.mulf %20, %24 : vector<16x16xf32>
    %26 = arith.truncf %25 : vector<16x16xf32> to vector<16x16xbf16>
    %27 = arith.truncf %12 : vector<16x8xf32> to vector<16x8xbf16>
    %cst_16 = arith.constant dense<0.000000e+00> : vector<16x8xf32>
    %28 = tpu.matmul %26, %27, %cst_16 {dimension_numbers = #tpu.dot_dimension_numbers<[1], [0], [0], [1], [0, 0, 1, 1], [], []>} : vector<16x16xbf16>, vector<16x8xbf16>, vector<16x8xf32> -> vector<16x8xf32>
    %c0_17 = arith.constant 0 : index
    %c0_18 = arith.constant 0 : index
    %29 = vector.load %arg18[%c0_17, %c0_18] : memref<16x64xf32, #tpu.memory_space<vmem>>, vector<16x64xf32>
    %30 = arith.truncf %28 : vector<16x8xf32> to vector<16x8xbf16>
    %c0_19 = arith.constant 0 : index
    %c0_20 = arith.constant 0 : index
    %c0_21 = arith.constant 0 : index
    %31 = vector.load %arg8[%c0_19, %c0_20, %c0_21] : memref<1x8x64xbf16, #tpu.memory_space<vmem>>, vector<1x8x64xbf16>
    %32 = vector.shape_cast %31 : vector<1x8x64xbf16> to vector<8x64xbf16>
    %cst_22 = arith.constant dense<0.000000e+00> : vector<16x64xf32>
    %33 = tpu.matmul %30, %32, %cst_22 {dimension_numbers = #tpu.dot_dimension_numbers<[1], [0], [0], [1], [0, 0, 1, 1], [], []>} : vector<16x8xbf16>, vector<8x64xbf16>, vector<16x64xf32> -> vector<16x64xf32>
    %34 = arith.addf %29, %33 : vector<16x64xf32>
    %c0_23 = arith.constant 0 : index
    %c0_24 = arith.constant 0 : index
    %35 = vector.load %arg18[%c0_23, %c0_24] : memref<16x64xf32, #tpu.memory_space<vmem>>, vector<16x64xf32>
    tpu.vector_store %arg18[%c0_23, %c0_24], %34 {strides = array<i32>} : memref<16x64xf32, #tpu.memory_space<vmem>>, vector<16x64xf32>,
    %c7_i32 = arith.constant 7 : i32
    %36 = arith.cmpi eq, %arg1, %c7_i32 : i32
    %37 = arith.extui %36 : i1 to i32
    %c0_i32_25 = arith.constant 0 : i32
    %38 = arith.cmpi ne, %37, %c0_i32_25 : i32
    scf.if %38 {
      %c0_26 = arith.constant 0 : index
      %c0_27 = arith.constant 0 : index
      %39 = vector.load %arg18[%c0_26, %c0_27] : memref<16x64xf32, #tpu.memory_space<vmem>>, vector<16x64xf32>
      %c0_28 = arith.constant 0 : index
      %c0_29 = arith.constant 0 : index
      %40 = vector.load %arg9[%c0_28, %c0_29] : memref<1x64xf32, #tpu.memory_space<vmem>>, vector<1x64xf32>
      %41 = vector.broadcast %40 : vector<1x64xf32> to vector<16x64xf32>
      %42 = arith.addf %39, %41 : vector<16x64xf32>
      %c0_30 = arith.constant 0 : index
      %c0_31 = arith.constant 0 : index
      %43 = vector.load %arg10[%c0_30, %c0_31] : memref<1x64xf32, #tpu.memory_space<vmem>>, vector<1x64xf32>
      %c0_32 = arith.constant 0 : index
      %c0_33 = arith.constant 0 : index
      %44 = vector.load %arg11[%c0_32, %c0_33] : memref<1x64xf32, #tpu.memory_space<vmem>>, vector<1x64xf32>
      %cst_34 = arith.constant dense<0.000000e+00> : vector<16xf32>
      %45 = vector.multi_reduction <add>, %42, %cst_34 [1] : vector<16x64xf32> to vector<16xf32>
      %46 = vector.shape_cast %45 : vector<16xf32> to vector<16x1xf32>
      %cst_35 = arith.constant 6.400000e+01 : f32
      %47 = vector.broadcast %cst_35 : f32 to vector<16x1xf32>
      %48 = arith.divf %46, %47 : vector<16x1xf32>
      %49 = vector.broadcast %48 : vector<16x1xf32> to vector<16x64xf32>
      %50 = arith.subf %42, %49 : vector<16x64xf32>
      %51 = arith.mulf %50, %50 : vector<16x64xf32>
      %cst_36 = arith.constant dense<0.000000e+00> : vector<16xf32>
      %52 = vector.multi_reduction <add>, %51, %cst_36 [1] : vector<16x64xf32> to vector<16xf32>
      %53 = vector.shape_cast %52 : vector<16xf32> to vector<16x1xf32>
      %cst_37 = arith.constant 6.400000e+01 : f32
      %54 = vector.broadcast %cst_37 : f32 to vector<16x1xf32>
      %55 = arith.divf %53, %54 : vector<16x1xf32>
      %cst_38 = arith.constant 9.99999974E-6 : f32
      %56 = vector.broadcast %cst_38 : f32 to vector<16x1xf32>
      %57 = arith.addf %55, %56 : vector<16x1xf32>
      %58 = math.rsqrt %57 : vector<16x1xf32>
      %59 = vector.broadcast %58 : vector<16x1xf32> to vector<16x64xf32>
      %60 = arith.mulf %50, %59 : vector<16x64xf32>
      %61 = vector.broadcast %43 : vector<1x64xf32> to vector<16x64xf32>
      %62 = arith.mulf %60, %61 : vector<16x64xf32>
      %63 = vector.broadcast %44 : vector<1x64xf32> to vector<16x64xf32>
      %64 = arith.addf %62, %63 : vector<16x64xf32>
      %65 = arith.truncf %64 : vector<16x64xf32> to vector<16x64xbf16>
      %c0_39 = arith.constant 0 : index
      %c0_40 = arith.constant 0 : index
      %66 = vector.load %arg12[%c0_39, %c0_40] : memref<64x256xbf16, #tpu.memory_space<vmem>>, vector<64x256xbf16>
      %cst_41 = arith.constant dense<0.000000e+00> : vector<16x256xf32>
      %67 = tpu.matmul %65, %66, %cst_41 {dimension_numbers = #tpu.dot_dimension_numbers<[1], [0], [0], [1], [0, 0, 1, 1], [], []>} : vector<16x64xbf16>, vector<64x256xbf16>, vector<16x256xf32> -> vector<16x256xf32>
      %c0_42 = arith.constant 0 : index
      %c0_43 = arith.constant 0 : index
      %68 = vector.load %arg13[%c0_42, %c0_43] : memref<1x256xf32, #tpu.memory_space<vmem>>, vector<1x256xf32>
      %69 = vector.broadcast %68 : vector<1x256xf32> to vector<16x256xf32>
      %70 = arith.addf %67, %69 : vector<16x256xf32>
      %cst_44 = arith.constant 5.000000e-01 : f32
      %71 = vector.broadcast %cst_44 : f32 to vector<16x256xf32>
      %72 = arith.mulf %71, %70 : vector<16x256xf32>
      %cst_45 = arith.constant 4.471500e-02 : f32
      %73 = vector.broadcast %cst_45 : f32 to vector<16x256xf32>
      %74 = arith.mulf %73, %70 : vector<16x256xf32>
      %75 = arith.mulf %74, %70 : vector<16x256xf32>
      %76 = arith.mulf %75, %70 : vector<16x256xf32>
      %77 = arith.addf %70, %76 : vector<16x256xf32>
      %cst_46 = arith.constant 0.797884583 : f32
      %78 = vector.broadcast %cst_46 : f32 to vector<16x256xf32>
      %79 = arith.mulf %78, %77 : vector<16x256xf32>
      %80 = math.tanh %79 : vector<16x256xf32>
      %cst_47 = arith.constant 1.000000e+00 : f32
      %81 = vector.broadcast %cst_47 : f32 to vector<16x256xf32>
      %82 = arith.addf %81, %80 : vector<16x256xf32>
      %83 = arith.mulf %72, %82 : vector<16x256xf32>
      %84 = arith.truncf %83 : vector<16x256xf32> to vector<16x256xbf16>
      %c0_48 = arith.constant 0 : index
      %c0_49 = arith.constant 0 : index
      %85 = vector.load %arg14[%c0_48, %c0_49] : memref<256x64xbf16, #tpu.memory_space<vmem>>, vector<256x64xbf16>
      %cst_50 = arith.constant dense<0.000000e+00> : vector<16x64xf32>
      %86 = tpu.matmul %84, %85, %cst_50 {dimension_numbers = #tpu.dot_dimension_numbers<[1], [0], [0], [1], [0, 0, 1, 1], [], []>} : vector<16x256xbf16>, vector<256x64xbf16>, vector<16x64xf32> -> vector<16x64xf32>
      %c0_51 = arith.constant 0 : index
      %c0_52 = arith.constant 0 : index
      %87 = vector.load %arg15[%c0_51, %c0_52] : memref<1x64xf32, #tpu.memory_space<vmem>>, vector<1x64xf32>
      %88 = vector.broadcast %87 : vector<1x64xf32> to vector<16x64xf32>
      %89 = arith.addf %86, %88 : vector<16x64xf32>
      %90 = arith.addf %42, %89 : vector<16x64xf32>
      %c0_53 = arith.constant 0 : index
      %c0_54 = arith.constant 0 : index
      %c0_55 = arith.constant 0 : index
      %91 = vector.load %arg16[%c0_53, %c0_54, %c0_55] : memref<1x16x64xf32, #tpu.memory_space<vmem>>, vector<1x16x64xf32>
      %92 = vector.shape_cast %91 : vector<1x16x64xf32> to vector<16x64xf32>
      %93 = vector.shape_cast %90 : vector<16x64xf32> to vector<1x16x64xf32>
      tpu.vector_store %arg16[%c0_53, %c0_54, %c0_55], %93 {strides = array<i32>} : memref<1x16x64xf32, #tpu.memory_space<vmem>>, vector<1x16x64xf32>,
    } else {
    }
    return
  }
  func.func @transform_0(%arg0: i32, %arg1: i32) -> (i32, i32, i32) {
    %c0_i32 = arith.constant 0 : i32
    %c0_i32_0 = arith.constant 0 : i32
    %c0_i32_1 = arith.constant 0 : i32
    return %arg0, %c0_i32, %c0_i32_0 : i32, i32, i32
  }
  func.func @transform_1(%arg0: i32, %arg1: i32) -> (i32, i32) {
    %c0_i32 = arith.constant 0 : i32
    %c0_i32_0 = arith.constant 0 : i32
    %c0_i32_1 = arith.constant 0 : i32
    return %c0_i32, %c0_i32_0 : i32, i32
  }
  func.func @transform_2(%arg0: i32, %arg1: i32) -> (i32, i32) {
    %c0_i32 = arith.constant 0 : i32
    %c0_i32_0 = arith.constant 0 : i32
    %c0_i32_1 = arith.constant 0 : i32
    return %c0_i32, %c0_i32_0 : i32, i32
  }
  func.func @transform_3(%arg0: i32, %arg1: i32) -> (i32, i32, i32) {
    %c0_i32 = arith.constant 0 : i32
    %c0_i32_0 = arith.constant 0 : i32
    %c0_i32_1 = arith.constant 0 : i32
    return %arg1, %c0_i32, %c0_i32_0 : i32, i32, i32
  }
  func.func @transform_4(%arg0: i32, %arg1: i32) -> (i32, i32, i32) {
    %c0_i32 = arith.constant 0 : i32
    %c0_i32_0 = arith.constant 0 : i32
    %c0_i32_1 = arith.constant 0 : i32
    return %arg1, %c0_i32, %c0_i32_0 : i32, i32, i32
  }
  func.func @transform_5(%arg0: i32, %arg1: i32) -> (i32, i32, i32) {
    %c0_i32 = arith.constant 0 : i32
    %c0_i32_0 = arith.constant 0 : i32
    %c0_i32_1 = arith.constant 0 : i32
    return %arg1, %c0_i32, %c0_i32_0 : i32, i32, i32
  }
  func.func @transform_6(%arg0: i32, %arg1: i32) -> (i32, i32, i32) {
    %c0_i32 = arith.constant 0 : i32
    %c0_i32_0 = arith.constant 0 : i32
    %c0_i32_1 = arith.constant 0 : i32
    return %arg1, %c0_i32, %c0_i32_0 : i32, i32, i32
  }
  func.func @transform_7(%arg0: i32, %arg1: i32) -> (i32, i32) {
    %c0_i32 = arith.constant 0 : i32
    %c0_i32_0 = arith.constant 0 : i32
    %c0_i32_1 = arith.constant 0 : i32
    return %c0_i32, %c0_i32_0 : i32, i32
  }
  func.func @transform_8(%arg0: i32, %arg1: i32) -> (i32, i32) {
    %c0_i32 = arith.constant 0 : i32
    %c0_i32_0 = arith.constant 0 : i32
    %c0_i32_1 = arith.constant 0 : i32
    return %c0_i32, %c0_i32_0 : i32, i32
  }
  func.func @transform_9(%arg0: i32, %arg1: i32) -> (i32, i32) {
    %c0_i32 = arith.constant 0 : i32
    %c0_i32_0 = arith.constant 0 : i32
    %c0_i32_1 = arith.constant 0 : i32
    return %c0_i32, %c0_i32_0 : i32, i32
  }
  func.func @transform_10(%arg0: i32, %arg1: i32) -> (i32, i32) {
    %c0_i32 = arith.constant 0 : i32
    %c0_i32_0 = arith.constant 0 : i32
    %c0_i32_1 = arith.constant 0 : i32
    return %c0_i32, %c0_i32_0 : i32, i32
  }
  func.func @transform_11(%arg0: i32, %arg1: i32) -> (i32, i32) {
    %c0_i32 = arith.constant 0 : i32
    %c0_i32_0 = arith.constant 0 : i32
    %c0_i32_1 = arith.constant 0 : i32
    return %c0_i32, %c0_i32_0 : i32, i32
  }
  func.func @transform_12(%arg0: i32, %arg1: i32) -> (i32, i32) {
    %c0_i32 = arith.constant 0 : i32
    %c0_i32_0 = arith.constant 0 : i32
    %c0_i32_1 = arith.constant 0 : i32
    return %c0_i32, %c0_i32_0 : i32, i32
  }
  func.func @transform_13(%arg0: i32, %arg1: i32) -> (i32, i32) {
    %c0_i32 = arith.constant 0 : i32
    %c0_i32_0 = arith.constant 0 : i32
    %c0_i32_1 = arith.constant 0 : i32
    return %c0_i32, %c0_i32_0 : i32, i32
  }
  func.func @transform_14(%arg0: i32, %arg1: i32) -> (i32, i32, i32) {
    %c0_i32 = arith.constant 0 : i32
    %c0_i32_0 = arith.constant 0 : i32
    %c0_i32_1 = arith.constant 0 : i32
    return %arg0, %c0_i32, %c0_i32_0 : i32, i32, i32
  }
}

</mosaic_0001>

<llo_original>
// kernel: tpu_custom_call.1
$region0: #{tpu_custom_call.1}
  #allocation0 [shape = 'u32[]', space=smem, size = 0x4, offset = 0x4, fixed_abs, tag = 'smem constant byte address 0x4 - core index']
  #allocation1 [shape = 'u32[72,128]{1,0:T(1,128)}', space=vmem, size = 0x9000, scoped, tag = 'internal scratch']
  #allocation2 [shape = 'bf16[16,64]{1,0:T(8,128)(2,1)}', space=vmem, size = 0x1000, scoped, tag = 'scratch operand']
  #allocation3 [shape = 'f32[16,64]{1,0:T(8,128)}', space=vmem, size = 0x2000, scoped, tag = 'scratch operand']
  %s0 = inlined_call_operand.vmem [shape: f32[2,16,64], index: 0, kind: input, shape index: {}]
  %s1 = inlined_call_operand.vmem [shape: f32[1,64], index: 1, kind: input, shape index: {}]
  %s2 = inlined_call_operand.vmem [shape: f32[1,64], index: 2, kind: input, shape index: {}]
  %s3 = inlined_call_operand.vmem [shape: bf16[8,64,8], index: 3, kind: input, shape index: {}]
  %s4 = inlined_call_operand.vmem [shape: bf16[8,64,8], index: 4, kind: input, shape index: {}]
  %s5 = inlined_call_operand.vmem [shape: bf16[8,64,8], index: 5, kind: input, shape index: {}]
  %s6 = inlined_call_operand.vmem [shape: bf16[8,8,64], index: 6, kind: input, shape index: {}]
  %s7 = inlined_call_operand.vmem [shape: f32[1,64], index: 7, kind: input, shape index: {}]
  %s8 = inlined_call_operand.vmem [shape: f32[1,64], index: 8, kind: input, shape index: {}]
  %s9 = inlined_call_operand.vmem [shape: f32[1,64], index: 9, kind: input, shape index: {}]
  %s10 = inlined_call_operand.vmem [shape: bf16[64,256], index: 10, kind: input, shape index: {}]
  %s11 = inlined_call_operand.vmem [shape: f32[1,256], index: 11, kind: input, shape index: {}]
  %s12 = inlined_call_operand.vmem [shape: bf16[256,64], index: 12, kind: input, shape index: {}]
  %s13 = inlined_call_operand.vmem [shape: f32[1,64], index: 13, kind: input, shape index: {}]
  %s14 = inlined_call_operand.hbm [shape: f32[2,16,64], index: 14, kind: output, shape index: {}]
  %s15 = sld [smem:[#allocation0]]
  $region97: #{tpu_custom_call.1} parent=0
    _
  %s17 = ssub.s32 1, %s15
  %s18 = scalar_select 0, %s17, %s15
  $region1: #{tpu_custom_call.1} parent=0
    #allocation4 [shape = 'u8[16384]{0}', space=vmem, size = 0x4000, scoped, tag = 'output window, operand 0']
    #allocation5 [shape = 's32[2]{0}', space=sflag, size = 0x8, scoped, tag = 'scoped memory for tpu_custom_call.1']
    %19 = vsyncpa [#allocation5], 0
    %s20 = scalar_lea.sflag [#allocation5], 1
    %21 = vsyncpa %s20, 0
    loop: start=0, step=1, limit=18
    $region2: #{tpu_custom_call.1} parent=1 // loop_pre_header
      _
    $region3: #{tpu_custom_call.1} parent=1 // loop_header
      %s23 = sphi 0, %s27
      %p24 = scmp.ge.s32.totalorder %s23, 18
      %s30 = sphi 0, %s42
      %s31 = sphi 0, %s38
      %s32 = sphi 0, %s30
      %s33 = sphi 0, %s31
      %s34 = sphi 0, %s32
      %s35 = sphi 0, %s33
      %s45 = sphi 0, %s47
      %s48 = sphi 0, %s45
      %s49 = sphi 0, %s48
      %s65 = sphi 0, %s49
      %s69 = sphi 0, %s69
      %s71 = sphi 0, %s69
      %s72 = sphi 0, %s71
      %s86 = sphi 0, %s72
      %s90 = sphi 0, %s90
      %s92 = sphi 0, %s90
      %s93 = sphi 0, %s92
      %s107 = sphi 0, %s93
      %s113 = sphi 0, %s115
      %s116 = sphi 0, %s113
      %s117 = sphi 0, %s116
      %s133 = sphi 0, %s117
      %s139 = sphi 0, %s141
      %s142 = sphi 0, %s139
      %s143 = sphi 0, %s142
      %s159 = sphi 0, %s143
      %s165 = sphi 0, %s167
      %s168 = sphi 0, %s165
      %s169 = sphi 0, %s168
      %s185 = sphi 0, %s169
      %s191 = sphi 0, %s193
      %s194 = sphi 0, %s191
      %s195 = sphi 0, %s194
      %s211 = sphi 0, %s195
      %s215 = sphi 0, %s215
      %s217 = sphi 0, %s215
      %s218 = sphi 0, %s217
      %s232 = sphi 0, %s218
      %s236 = sphi 0, %s236
      %s238 = sphi 0, %s236
      %s239 = sphi 0, %s238
      %s253 = sphi 0, %s239
      %s257 = sphi 0, %s257
      %s259 = sphi 0, %s257
      %s260 = sphi 0, %s259
      %s274 = sphi 0, %s260
      %s278 = sphi 0, %s278
      %s280 = sphi 0, %s278
      %s281 = sphi 0, %s280
      %s295 = sphi 0, %s281
      %s299 = sphi 0, %s299
      %s301 = sphi 0, %s299
      %s302 = sphi 0, %s301
      %s316 = sphi 0, %s302
      %s320 = sphi 0, %s320
      %s322 = sphi 0, %s320
      %s323 = sphi 0, %s322
      %s337 = sphi 0, %s323
      %s341 = sphi 0, %s341
      %s343 = sphi 0, %s341
      %s344 = sphi 0, %s343
      %s358 = sphi 0, %s344
      %s364 = sphi 0, %s366
      %s367 = sphi 0, %s364
      %s368 = sphi 0, %s367
      %s384 = sphi 0, %s368
    $region4: #{tpu_custom_call.1} parent=1 // loop_header_branch
      %26 = sbr.rel (%p24) target = $region8
    $region5: #{tpu_custom_call.1} parent=1 // loop_body
      %s28 = ssub.s32 %s23, 1
      %s29 = ssub.s32 %s23, 2
      %s36 = sadd.s32 1, %s31
      %p37 = scmp.ge.s32.totalorder %s36, 8
      %s38 = scalar_select %p37, 0, %s36
      %s39 = sadd.s32 1, %s30
      %s40 = scalar_select %p37, %s39, %s30
      %p41 = scmp.ge.s32.totalorder %s40, 2
      %s42 = scalar_select %p41, 0, %s40
      %s43 = ssub.s32 %s30, %s42
      %p44 = scmp.eq.s32.totalorder %s43, 0
      %s46 = sadd.s32 %s45, 1
      %s47 = scalar_select %p44, %s45, %s46
      %p50 = pneg %p44
      %p51 = scmp.eq.s32.totalorder %s23, 15
      %p52 = por %p50, %p51
      %p53 = scmp.ne.s32.totalorder %s45, %s48
      %p54 = scmp.eq.s32.totalorder %s23, 0
      %p55 = por %p53, %p54
      %p56 = scmp.ne.s32.totalorder %s45, %s48
      %p57 = scmp.eq.s32.totalorder %s28, 15
      %p58 = por %p56, %p57
      %p59 = scmp.ne.s32.totalorder %s48, %s49
      %p60 = scmp.eq.s32.totalorder %s28, 0
      %p61 = por %p59, %p60
      %p62 = scmp.ne.s32.totalorder %s48, %s49
      %p63 = scmp.eq.s32.totalorder %s29, 15
      %p64 = por %p62, %p63
      %p66 = scmp.ne.s32.totalorder %s49, %s65
      %p67 = scmp.eq.s32.totalorder %s29, 0
      %p68 = por %p66, %p67
      %s70 = sadd.s32 %s69, 1
      %p73 = scmp.eq.s32.totalorder %s23, 15
      %p74 = scmp.ne.s32.totalorder %s69, %s71
      %p75 = scmp.eq.s32.totalorder %s23, 0
      %p76 = por %p74, %p75
      %p77 = scmp.ne.s32.totalorder %s69, %s71
      %p78 = scmp.eq.s32.totalorder %s28, 15
      %p79 = por %p77, %p78
      %p80 = scmp.ne.s32.totalorder %s71, %s72
      %p81 = scmp.eq.s32.totalorder %s28, 0
      %p82 = por %p80, %p81
      %p83 = scmp.ne.s32.totalorder %s71, %s72
      %p84 = scmp.eq.s32.totalorder %s29, 15
      %p85 = por %p83, %p84
      %p87 = scmp.ne.s32.totalorder %s72, %s86
      %p88 = scmp.eq.s32.totalorder %s29, 0
      %p89 = por %p87, %p88
      %s91 = sadd.s32 %s90, 1
      %p94 = scmp.eq.s32.totalorder %s23, 15
      %p95 = scmp.ne.s32.totalorder %s90, %s92
      %p96 = scmp.eq.s32.totalorder %s23, 0
      %p97 = por %p95, %p96
      %p98 = scmp.ne.s32.totalorder %s90, %s92
      %p99 = scmp.eq.s32.totalorder %s28, 15
      %p100 = por %p98, %p99
      %p101 = scmp.ne.s32.totalorder %s92, %s93
      %p102 = scmp.eq.s32.totalorder %s28, 0
      %p103 = por %p101, %p102
      %p104 = scmp.ne.s32.totalorder %s92, %s93
      %p105 = scmp.eq.s32.totalorder %s29, 15
      %p106 = por %p104, %p105
      %p108 = scmp.ne.s32.totalorder %s93, %s107
      %p109 = scmp.eq.s32.totalorder %s29, 0
      %p110 = por %p108, %p109
      %s111 = ssub.s32 %s31, %s38
      %p112 = scmp.eq.s32.totalorder %s111, 0
      %s114 = sadd.s32 %s113, 1
      %s115 = scalar_select %p112, %s113, %s114
      %p118 = pneg %p112
      %p119 = scmp.eq.s32.totalorder %s23, 15
      %p120 = por %p118, %p119
      %p121 = scmp.ne.s32.totalorder %s113, %s116
      %p122 = scmp.eq.s32.totalorder %s23, 0
      %p123 = por %p121, %p122
      %p124 = scmp.ne.s32.totalorder %s113, %s116
      %p125 = scmp.eq.s32.totalorder %s28, 15
      %p126 = por %p124, %p125
      %p127 = scmp.ne.s32.totalorder %s116, %s117
      %p128 = scmp.eq.s32.totalorder %s28, 0
      %p129 = por %p127, %p128
      %p130 = scmp.ne.s32.totalorder %s116, %s117
      %p131 = scmp.eq.s32.totalorder %s29, 15
      %p132 = por %p130, %p131
      %p134 = scmp.ne.s32.totalorder %s117, %s133
      %p135 = scmp.eq.s32.totalorder %s29, 0
      %p136 = por %p134, %p135
      %s137 = ssub.s32 %s31, %s38
      %p138 = scmp.eq.s32.totalorder %s137, 0
      %s140 = sadd.s32 %s139, 1
      %s141 = scalar_select %p138, %s139, %s140
      %p144 = pneg %p138
      %p145 = scmp.eq.s32.totalorder %s23, 15
      %p146 = por %p144, %p145
      %p147 = scmp.ne.s32.totalorder %s139, %s142
      %p148 = scmp.eq.s32.totalorder %s23, 0
      %p149 = por %p147, %p148
      %p150 = scmp.ne.s32.totalorder %s139, %s142
      %p151 = scmp.eq.s32.totalorder %s28, 15
      %p152 = por %p150, %p151
      %p153 = scmp.ne.s32.totalorder %s142, %s143
      %p154 = scmp.eq.s32.totalorder %s28, 0
      %p155 = por %p153, %p154
      %p156 = scmp.ne.s32.totalorder %s142, %s143
      %p157 = scmp.eq.s32.totalorder %s29, 15
      %p158 = por %p156, %p157
      %p160 = scmp.ne.s32.totalorder %s143, %s159
      %p161 = scmp.eq.s32.totalorder %s29, 0
      %p162 = por %p160, %p161
      %s163 = ssub.s32 %s31, %s38
      %p164 = scmp.eq.s32.totalorder %s163, 0
      %s166 = sadd.s32 %s165, 1
      %s167 = scalar_select %p164, %s165, %s166
      %p170 = pneg %p164
      %p171 = scmp.eq.s32.totalorder %s23, 15
      %p172 = por %p170, %p171
      %p173 = scmp.ne.s32.totalorder %s165, %s168
      %p174 = scmp.eq.s32.totalorder %s23, 0
      %p175 = por %p173, %p174
      %p176 = scmp.ne.s32.totalorder %s165, %s168
      %p177 = scmp.eq.s32.totalorder %s28, 15
      %p178 = por %p176, %p177
      %p179 = scmp.ne.s32.totalorder %s168, %s169
      %p180 = scmp.eq.s32.totalorder %s28, 0
      %p181 = por %p179, %p180
      %p182 = scmp.ne.s32.totalorder %s168, %s169
      %p183 = scmp.eq.s32.totalorder %s29, 15
      %p184 = por %p182, %p183
      %p186 = scmp.ne.s32.totalorder %s169, %s185
      %p187 = scmp.eq.s32.totalorder %s29, 0
      %p188 = por %p186, %p187
      %s189 = ssub.s32 %s31, %s38
      %p190 = scmp.eq.s32.totalorder %s189, 0
      %s192 = sadd.s32 %s191, 1
      %s193 = scalar_select %p190, %s191, %s192
      %p196 = pneg %p190
      %p197 = scmp.eq.s32.totalorder %s23, 15
      %p198 = por %p196, %p197
      %p199 = scmp.ne.s32.totalorder %s191, %s194
      %p200 = scmp.eq.s32.totalorder %s23, 0
      %p201 = por %p199, %p200
      %p202 = scmp.ne.s32.totalorder %s191, %s194
      %p203 = scmp.eq.s32.totalorder %s28, 15
      %p204 = por %p202, %p203
      %p205 = scmp.ne.s32.totalorder %s194, %s195
      %p206 = scmp.eq.s32.totalorder %s28, 0
      %p207 = por %p205, %p206
      %p208 = scmp.ne.s32.totalorder %s194, %s195
      %p209 = scmp.eq.s32.totalorder %s29, 15
      %p210 = por %p208, %p209
      %p212 = scmp.ne.s32.totalorder %s195, %s211
      %p213 = scmp.eq.s32.totalorder %s29, 0
      %p214 = por %p212, %p213
      %s216 = sadd.s32 %s215, 1
      %p219 = scmp.eq.s32.totalorder %s23, 15
      %p220 = scmp.ne.s32.totalorder %s215, %s217
      %p221 = scmp.eq.s32.totalorder %s23, 0
      %p222 = por %p220, %p221
      %p223 = scmp.ne.s32.totalorder %s215, %s217
      %p224 = scmp.eq.s32.totalorder %s28, 15
      %p225 = por %p223, %p224
      %p226 = scmp.ne.s32.totalorder %s217, %s218
      %p227 = scmp.eq.s32.totalorder %s28, 0
      %p228 = por %p226, %p227
      %p229 = scmp.ne.s32.totalorder %s217, %s218
      %p230 = scmp.eq.s32.totalorder %s29, 15
      %p231 = por %p229, %p230
      %p233 = scmp.ne.s32.totalorder %s218, %s232
      %p234 = scmp.eq.s32.totalorder %s29, 0
      %p235 = por %p233, %p234
      %s237 = sadd.s32 %s236, 1
      %p240 = scmp.eq.s32.totalorder %s23, 15
      %p241 = scmp.ne.s32.totalorder %s236, %s238
      %p242 = scmp.eq.s32.totalorder %s23, 0
      %p243 = por %p241, %p242
      %p244 = scmp.ne.s32.totalorder %s236, %s238
      %p245 = scmp.eq.s32.totalorder %s28, 15
      %p246 = por %p244, %p245
      %p247 = scmp.ne.s32.totalorder %s238, %s239
      %p248 = scmp.eq.s32.totalorder %s28, 0
      %p249 = por %p247, %p248
      %p250 = scmp.ne.s32.totalorder %s238, %s239
      %p251 = scmp.eq.s32.totalorder %s29, 15
      %p252 = por %p250, %p251
      %p254 = scmp.ne.s32.totalorder %s239, %s253
      %p255 = scmp.eq.s32.totalorder %s29, 0
      %p256 = por %p254, %p255
      %s258 = sadd.s32 %s257, 1
      %p261 = scmp.eq.s32.totalorder %s23, 15
      %p262 = scmp.ne.s32.totalorder %s257, %s259
      %p263 = scmp.eq.s32.totalorder %s23, 0
      %p264 = por %p262, %p263
      %p265 = scmp.ne.s32.totalorder %s257, %s259
      %p266 = scmp.eq.s32.totalorder %s28, 15
      %p267 = por %p265, %p266
      %p268 = scmp.ne.s32.totalorder %s259, %s260
      %p269 = scmp.eq.s32.totalorder %s28, 0
      %p270 = por %p268, %p269
      %p271 = scmp.ne.s32.totalorder %s259, %s260
      %p272 = scmp.eq.s32.totalorder %s29, 15
      %p273 = por %p271, %p272
      %p275 = scmp.ne.s32.totalorder %s260, %s274
      %p276 = scmp.eq.s32.totalorder %s29, 0
      %p277 = por %p275, %p276
      %s279 = sadd.s32 %s278, 1
      %p282 = scmp.eq.s32.totalorder %s23, 15
      %p283 = scmp.ne.s32.totalorder %s278, %s280
      %p284 = scmp.eq.s32.totalorder %s23, 0
      %p285 = por %p283, %p284
      %p286 = scmp.ne.s32.totalorder %s278, %s280
      %p287 = scmp.eq.s32.totalorder %s28, 15
      %p288 = por %p286, %p287
      %p289 = scmp.ne.s32.totalorder %s280, %s281
      %p290 = scmp.eq.s32.totalorder %s28, 0
      %p291 = por %p289, %p290
      %p292 = scmp.ne.s32.totalorder %s280, %s281
      %p293 = scmp.eq.s32.totalorder %s29, 15
      %p294 = por %p292, %p293
      %p296 = scmp.ne.s32.totalorder %s281, %s295
      %p297 = scmp.eq.s32.totalorder %s29, 0
      %p298 = por %p296, %p297
      %s300 = sadd.s32 %s299, 1
      %p303 = scmp.eq.s32.totalorder %s23, 15
      %p304 = scmp.ne.s32.totalorder %s299, %s301
      %p305 = scmp.eq.s32.totalorder %s23, 0
      %p306 = por %p304, %p305
      %p307 = scmp.ne.s32.totalorder %s299, %s301
      %p308 = scmp.eq.s32.totalorder %s28, 15
      %p309 = por %p307, %p308
      %p310 = scmp.ne.s32.totalorder %s301, %s302
      %p311 = scmp.eq.s32.totalorder %s28, 0
      %p312 = por %p310, %p311
      %p313 = scmp.ne.s32.totalorder %s301, %s302
      %p314 = scmp.eq.s32.totalorder %s29, 15
      %p315 = por %p313, %p314
      %p317 = scmp.ne.s32.totalorder %s302, %s316
      %p318 = scmp.eq.s32.totalorder %s29, 0
      %p319 = por %p317, %p318
      %s321 = sadd.s32 %s320, 1
      %p324 = scmp.eq.s32.totalorder %s23, 15
      %p325 = scmp.ne.s32.totalorder %s320, %s322
      %p326 = scmp.eq.s32.totalorder %s23, 0
      %p327 = por %p325, %p326
      %p328 = scmp.ne.s32.totalorder %s320, %s322
      %p329 = scmp.eq.s32.totalorder %s28, 15
      %p330 = por %p328, %p329
      %p331 = scmp.ne.s32.totalorder %s322, %s323
      %p332 = scmp.eq.s32.totalorder %s28, 0
      %p333 = por %p331, %p332
      %p334 = scmp.ne.s32.totalorder %s322, %s323
      %p335 = scmp.eq.s32.totalorder %s29, 15
      %p336 = por %p334, %p335
      %p338 = scmp.ne.s32.totalorder %s323, %s337
      %p339 = scmp.eq.s32.totalorder %s29, 0
      %p340 = por %p338, %p339
      %s342 = sadd.s32 %s341, 1
      %p345 = scmp.eq.s32.totalorder %s23, 15
      %p346 = scmp.ne.s32.totalorder %s341, %s343
      %p347 = scmp.eq.s32.totalorder %s23, 0
      %p348 = por %p346, %p347
      %p349 = scmp.ne.s32.totalorder %s341, %s343
      %p350 = scmp.eq.s32.totalorder %s28, 15
      %p351 = por %p349, %p350
      %p352 = scmp.ne.s32.totalorder %s343, %s344
      %p353 = scmp.eq.s32.totalorder %s28, 0
      %p354 = por %p352, %p353
      %p355 = scmp.ne.s32.totalorder %s343, %s344
      %p356 = scmp.eq.s32.totalorder %s29, 15
      %p357 = por %p355, %p356
      %p359 = scmp.ne.s32.totalorder %s344, %s358
      %p360 = scmp.eq.s32.totalorder %s29, 0
      %p361 = por %p359, %p360
      %s362 = ssub.s32 %s30, %s42
      %p363 = scmp.eq.s32.totalorder %s362, 0
      %s365 = sadd.s32 %s364, 1
      %s366 = scalar_select %p363, %s364, %s365
      %p369 = pneg %p363
      %p370 = scmp.eq.s32.totalorder %s23, 15
      %p371 = por %p369, %p370
      %p372 = scmp.ne.s32.totalorder %s364, %s367
      %p373 = scmp.eq.s32.totalorder %s23, 0
      %p374 = por %p372, %p373
      %p375 = scmp.ne.s32.totalorder %s364, %s367
      %p376 = scmp.eq.s32.totalorder %s28, 15
      %p377 = por %p375, %p376
      %p378 = scmp.ne.s32.totalorder %s367, %s368
      %p379 = scmp.eq.s32.totalorder %s28, 0
      %p380 = por %p378, %p379
      %p381 = scmp.ne.s32.totalorder %s367, %s368
      %p382 = scmp.eq.s32.totalorder %s29, 15
      %p383 = por %p381, %p382
      %p385 = scmp.ne.s32.totalorder %s368, %s384
      %p386 = scmp.eq.s32.totalorder %s29, 0
      %p387 = por %p385, %p386
      %p388 = scmp.le.s32.totalorder 1, %s23
      %p389 = scmp.lt.s32.totalorder %s23, 17
      %p390 = pnand %p388, %p389
      %p391 = pneg %p390
      // Predicated region
      $region9: #{tpu_custom_call.1} parent=5 // pred_check
        _
      $region10: #{tpu_custom_call.1} parent=5 // pred_check_branch
        %393 = sbr.rel (%p390) target = $region12
      $region11: #{tpu_custom_call.1} parent=5 // pred_region
        %s394 = ssub.s32 %s23, 1
        // Predicated region
        $region13: #{tpu_custom_call.1} parent=11 // pred_check
          %p395 = pneg %p82
        $region14: #{tpu_custom_call.1} parent=11 // pred_check_branch
          %397 = sbr.rel (%p395) target = $region16
        $region15: #{tpu_custom_call.1} parent=11 // pred_region
          _
        $region16: #{tpu_custom_call.1} parent=11 // pred_fallthru
          _
        // Predicated region
        $region17: #{tpu_custom_call.1} parent=11 // pred_check
          %p398 = pneg %p103
        $region18: #{tpu_custom_call.1} parent=11 // pred_check_branch
          %400 = sbr.rel (%p398) target = $region20
        $region19: #{tpu_custom_call.1} parent=11 // pred_region
          _
        $region20: #{tpu_custom_call.1} parent=11 // pred_fallthru
          _
        // Predicated region
        $region21: #{tpu_custom_call.1} parent=11 // pred_check
          %p401 = pneg %p228
        $region22: #{tpu_custom_call.1} parent=11 // pred_check_branch
          %403 = sbr.rel (%p401) target = $region24
        $region23: #{tpu_custom_call.1} parent=11 // pred_region
          _
        $region24: #{tpu_custom_call.1} parent=11 // pred_fallthru
          _
        // Predicated region
        $region25: #{tpu_custom_call.1} parent=11 // pred_check
          %p404 = pneg %p249
        $region26: #{tpu_custom_call.1} parent=11 // pred_check_branch
          %406 = sbr.rel (%p404) target = $region28
        $region27: #{tpu_custom_call.1} parent=11 // pred_region
          _
        $region28: #{tpu_custom_call.1} parent=11 // pred_fallthru
          _
        // Predicated region
        $region29: #{tpu_custom_call.1} parent=11 // pred_check
          %p407 = pneg %p270
        $region30: #{tpu_custom_call.1} parent=11 // pred_check_branch
          %409 = sbr.rel (%p407) target = $region32
        $region31: #{tpu_custom_call.1} parent=11 // pred_region
          _
        $region32: #{tpu_custom_call.1} parent=11 // pred_fallthru
          _
        // Predicated region
        $region33: #{tpu_custom_call.1} parent=11 // pred_check
          %p410 = pneg %p291
        $region34: #{tpu_custom_call.1} parent=11 // pred_check_branch
          %412 = sbr.rel (%p410) target = $region36
        $region35: #{tpu_custom_call.1} parent=11 // pred_region
          _
        $region36: #{tpu_custom_call.1} parent=11 // pred_fallthru
          _
        // Predicated region
        $region37: #{tpu_custom_call.1} parent=11 // pred_check
          %p413 = pneg %p312
        $region38: #{tpu_custom_call.1} parent=11 // pred_check_branch
          %415 = sbr.rel (%p413) target = $region40
        $region39: #{tpu_custom_call.1} parent=11 // pred_region
          _
        $region40: #{tpu_custom_call.1} parent=11 // pred_fallthru
          _
        // Predicated region
        $region41: #{tpu_custom_call.1} parent=11 // pred_check
          %p416 = pneg %p333
        $region42: #{tpu_custom_call.1} parent=11 // pred_check_branch
          %418 = sbr.rel (%p416) target = $region44
        $region43: #{tpu_custom_call.1} parent=11 // pred_region
          _
        $region44: #{tpu_custom_call.1} parent=11 // pred_fallthru
          _
        // Predicated region
        $region45: #{tpu_custom_call.1} parent=11 // pred_check
          %p419 = pneg %p354
        $region46: #{tpu_custom_call.1} parent=11 // pred_check_branch
          %421 = sbr.rel (%p419) target = $region48
        $region47: #{tpu_custom_call.1} parent=11 // pred_region
          _
        $region48: #{tpu_custom_call.1} parent=11 // pred_fallthru
          _
      $region12: #{tpu_custom_call.1} parent=5 // pred_fallthru
        _
      %p422 = scmp.lt.s32.totalorder %s23, 16
      // Predicated region
      $region49: #{tpu_custom_call.1} parent=5 // pred_check
        %p423 = pneg %p422
      $region50: #{tpu_custom_call.1} parent=5 // pred_check_branch
        %425 = sbr.rel (%p423) target = $region52
      $region51: #{tpu_custom_call.1} parent=5 // pred_region
        // Predicated region
        $region53: #{tpu_custom_call.1} parent=51 // pred_check
          %p426 = pneg %p55
        $region54: #{tpu_custom_call.1} parent=51 // pred_check_branch
          %428 = sbr.rel (%p426) target = $region56
        $region55: #{tpu_custom_call.1} parent=51 // pred_region
          %p429 = scmp.lt.s32.totalorder %s30, 1
          %s430 = scalar_select %p429, %s30, 1
          %s431 = smul.addr %s430, 2
          %s432 = smul.addr %s431, 8
          %s433 = scalar_lea.vmem %s0, %s432
        $region56: #{tpu_custom_call.1} parent=51 // pred_fallthru
          _
        // Predicated region
        $region57: #{tpu_custom_call.1} parent=51 // pred_check
          %p434 = pneg %p123
        $region58: #{tpu_custom_call.1} parent=51 // pred_check_branch
          %436 = sbr.rel (%p434) target = $region60
        $region59: #{tpu_custom_call.1} parent=51 // pred_region
          %p437 = scmp.lt.s32.totalorder %s31, 7
          %s438 = scalar_select %p437, %s31, 7
          %s439 = smul.addr %s438, 8
          %s440 = smul.addr %s439, 4
          %s441 = scalar_lea.vmem %s3, %s440
        $region60: #{tpu_custom_call.1} parent=51 // pred_fallthru
          _
        // Predicated region
        $region61: #{tpu_custom_call.1} parent=51 // pred_check
          %p442 = pneg %p149
        $region62: #{tpu_custom_call.1} parent=51 // pred_check_branch
          %444 = sbr.rel (%p442) target = $region64
        $region63: #{tpu_custom_call.1} parent=51 // pred_region
          %p445 = scmp.lt.s32.totalorder %s31, 7
          %s446 = scalar_select %p445, %s31, 7
          %s447 = smul.addr %s446, 8
          %s448 = smul.addr %s447, 4
          %s449 = scalar_lea.vmem %s4, %s448
        $region64: #{tpu_custom_call.1} parent=51 // pred_fallthru
          _
        // Predicated region
        $region65: #{tpu_custom_call.1} parent=51 // pred_check
          %p450 = pneg %p175
        $region66: #{tpu_custom_call.1} parent=51 // pred_check_branch
          %452 = sbr.rel (%p450) target = $region68
        $region67: #{tpu_custom_call.1} parent=51 // pred_region
          %p453 = scmp.lt.s32.totalorder %s31, 7
          %s454 = scalar_select %p453, %s31, 7
          %s455 = smul.addr %s454, 8
          %s456 = smul.addr %s455, 4
          %s457 = scalar_lea.vmem %s5, %s456
        $region68: #{tpu_custom_call.1} parent=51 // pred_fallthru
          _
        // Predicated region
        $region69: #{tpu_custom_call.1} parent=51 // pred_check
          %p458 = pneg %p201
        $region70: #{tpu_custom_call.1} parent=51 // pred_check_branch
          %460 = sbr.rel (%p458) target = $region72
        $region71: #{tpu_custom_call.1} parent=51 // pred_region
          %p461 = scmp.lt.s32.totalorder %s31, 7
          %s462 = scalar_select %p461, %s31, 7
          %s463 = smul.addr %s462, 4
          %s464 = scalar_lea.vmem %s6, %s463
        $region72: #{tpu_custom_call.1} parent=51 // pred_fallthru
          _
      $region52: #{tpu_custom_call.1} parent=5 // pred_fallthru
        _
      %p465 = scmp.le.s32.totalorder 1, %s23
      %p466 = scmp.lt.s32.totalorder %s23, 17
      %p467 = pnand %p465, %p466
      %p468 = pneg %p467
      // Predicated region
      $region73: #{tpu_custom_call.1} parent=5 // pred_check
        _
      $region74: #{tpu_custom_call.1} parent=5 // pred_check_branch
        %470 = sbr.rel (%p467) target = $region76
      $region75: #{tpu_custom_call.1} parent=5 // pred_region
        %s471 = ssub.s32 %s23, 1
        %p472 = scmp.lt.s32.totalorder %s32, 1
        %s473 = scalar_select %p472, %s32, 1
        %s474 = smul.addr %s473, 2
        %s475 = smul.addr %s474, 8
        %s476 = scalar_lea.vmem %s0, %s475
        %p477 = pneg %p61
        %p478 = pneg %p58
        %p479 = pneg %p82
        %p480 = pneg %p79
        %p481 = pneg %p103
        %p482 = pneg %p100
        %p483 = scmp.lt.s32.totalorder %s33, 7
        %s484 = scalar_select %p483, %s33, 7
        %s485 = smul.addr %s484, 8
        %s486 = smul.addr %s485, 4
        %s487 = scalar_lea.vmem %s3, %s486
        %p488 = pneg %p129
        %p489 = pneg %p126
        %p490 = scmp.lt.s32.totalorder %s33, 7
        %s491 = scalar_select %p490, %s33, 7
        %s492 = smul.addr %s491, 8
        %s493 = smul.addr %s492, 4
        %s494 = scalar_lea.vmem %s4, %s493
        %p495 = pneg %p155
        %p496 = pneg %p152
        %p497 = scmp.lt.s32.totalorder %s33, 7
        %s498 = scalar_select %p497, %s33, 7
        %s499 = smul.addr %s498, 8
        %s500 = smul.addr %s499, 4
        %s501 = scalar_lea.vmem %s5, %s500
        %p502 = pneg %p181
        %p503 = pneg %p178
        %p504 = scmp.lt.s32.totalorder %s33, 7
        %s505 = scalar_select %p504, %s33, 7
        %s506 = smul.addr %s505, 4
        %s507 = scalar_lea.vmem %s6, %s506
        %p508 = pneg %p207
        %p509 = pneg %p204
        %p510 = pneg %p228
        %p511 = pneg %p225
        %p512 = pneg %p249
        %p513 = pneg %p246
        %p514 = pneg %p270
        %p515 = pneg %p267
        %p516 = pneg %p291
        %p517 = pneg %p288
        %p518 = pneg %p312
        %p519 = pneg %p309
        %p520 = pneg %p333
        %p521 = pneg %p330
        %p522 = pneg %p354
        %p523 = pneg %p351
        %p524 = pneg %p380
        %p525 = pneg %p377
        %s526 = sand.u32 %s367, 1
        %s527 = scalar_lea.sflag [#allocation5], %s526
        %s528 = sand.u32 %s367, 1
        %s529 = smul.addr %s528, 16
        %s530 = scalar_lea.vmem [#allocation4], %s529
        %p531 = scmp.lt.s32.totalorder %s32, 1
        %s532 = scalar_select %p531, %s32, 1
        %s533 = smul.addr %s532, 2
        %s534 = smul.addr %s533, 8
        %s535 = scalar_lea.vmem %s0, %s534
        %p536 = scmp.lt.s32.totalorder %s33, 7
        %s537 = scalar_select %p536, %s33, 7
        %s538 = smul.addr %s537, 8
        %s539 = smul.addr %s538, 4
        %s540 = scalar_lea.vmem %s3, %s539
        %p541 = scmp.lt.s32.totalorder %s33, 7
        %s542 = scalar_select %p541, %s33, 7
        %s543 = smul.addr %s542, 8
        %s544 = smul.addr %s543, 4
        %s545 = scalar_lea.vmem %s4, %s544
        %p546 = scmp.lt.s32.totalorder %s33, 7
        %s547 = scalar_select %p546, %s33, 7
        %s548 = smul.addr %s547, 8
        %s549 = smul.addr %s548, 4
        %s550 = scalar_lea.vmem %s5, %s549
        %p551 = scmp.lt.s32.totalorder %s33, 7
        %s552 = scalar_select %p551, %s33, 7
        %s553 = smul.addr %s552, 4
        %s554 = scalar_lea.vmem %s6, %s553
        %p556 = scmp.eq.s32.totalorder %s33, 0
        // Predicated region
        $region77: #{tpu_custom_call.1} parent=75 // pred_check
          %p557 = pneg %p556
        $region78: #{tpu_custom_call.1} parent=75 // pred_check_branch
          %559 = sbr.rel (%p557) target = $region80
        $region79: #{tpu_custom_call.1} parent=75 // pred_region
          %v560 = vld [vmem:[%s535] sm:$0xff]
          %v561 = vld [vmem:[%s535 + $0x8] sm:$0xff]
          %v562 = vld [vmem:[%s1] sm:$0x1]
          %v563 = vld [vmem:[%s2] sm:$0x1]
          %vm564 = vcmask 523264
          %v565 = vsel %vm564, %v560, 0.0
          %566 = vadd.xlane.f32.xlu0 %v565
          %v567 = vpop.xlane.xlu0 %566
          %v568 = vsel %vm564, %v561, 0.0
          %569 = vadd.xlane.f32.xlu0 %v568
          %v570 = vpop.xlane.xlu0 %569
          %v571 = vrcp.pop 64.0
          %v572 = vmul.f32 64.0, %v571
          %v573 = vsub.f32 1.0, %v572
          %v574 = vmul.f32 %v571, %v573
          %v575 = vadd.f32 %v571, %v574
          %vm576 = vweird.f32 %v571
          %v577 = vsel %vm576, %v571, %v575
          %v578 = vmul.f32 %v567, %v577
          %v579 = vmul.f32 %v570, %v577
          %v580 = vsub.f32 %v560, %v578
          %v581 = vsub.f32 %v561, %v579
          %v582 = vmul.f32 %v580, %v580
          %v583 = vmul.f32 %v581, %v581
          %v584 = vsel %vm564, %v582, 0.0
          %585 = vadd.xlane.f32.xlu0 %v584
          %v586 = vpop.xlane.xlu0 %585
          %v587 = vsel %vm564, %v583, 0.0
          %588 = vadd.xlane.f32.xlu0 %v587
          %v589 = vpop.xlane.xlu0 %588
          %v590 = vmul.f32 %v586, %v577
          %v591 = vmul.f32 %v589, %v577
          %v592 = vadd.f32 %v590, 1e-05
          %v593 = vadd.f32 %v591, 1e-05
          %v594 = vrsqrt.pop %v592
          %v595 = vmul.f32 %v594, %v592
          %v596 = vmul.f32 %v595, %v594
          %v597 = vmul.f32 0.5, %v596
          %v598 = vsub.f32 1.5, %v597
          %v599 = vmul.f32 %v594, %v598
          %vm600 = vweird.f32 %v592
          %vm601 = vweird.f32 %v594
          %vm602 = vmor %vm600, %vm601
          %v603 = vsel %vm602, %v594, %v599
          %v604 = vrsqrt.pop %v593
          %v605 = vmul.f32 %v604, %v593
          %v606 = vmul.f32 %v605, %v604
          %v607 = vmul.f32 0.5, %v606
          %v608 = vsub.f32 1.5, %v607
          %v609 = vmul.f32 %v604, %v608
          %vm610 = vweird.f32 %v593
          %vm611 = vweird.f32 %v604
          %vm612 = vmor %vm610, %vm611
          %v613 = vsel %vm612, %v604, %v609
          %v614 = vmul.f32 %v580, %v603
          %v615 = vmul.f32 %v581, %v613
          %v617 = vperm.slane %v562, 0
          %v619 = vmul.f32 %v614, %v617
          %v620 = vmul.f32 %v615, %v617
          %v622 = vperm.slane %v563, 0
          %v624 = vadd.f32 %v619, %v622
          %v625 = vadd.f32 %v620, %v622
          %v626 = vpack.c.bf16 %v624, %v624
          %v627 = vpack.c.bf16 %v625, %v625
          %vm628 = vcmask 519168
          %629 = vst.msk [vmem:[#allocation2] sm:$0xf] %vm628, %v626
          %630 = vst.msk [vmem:[#allocation2 + $0x4] sm:$0xf] %vm628, %v627
          %631 = vst.msk [vmem:[#allocation3] sm:$0xff] %vm564, %v560
          %632 = vst.msk [vmem:[#allocation3 + $0x8] sm:$0xff] %vm564, %v561
        $region80: #{tpu_custom_call.1} parent=75 // pred_fallthru
          _
        %v633 = vld [vmem:[#allocation2] sm:$0xf]
        %v634 = vld [vmem:[#allocation2 + $0x4] sm:$0xf]
        %v635 = vld [vmem:[%s540] sm:$0xf]
        %v636 = vld [vmem:[%s540 + $0x4] sm:$0xf]
        %v637 = vld [vmem:[%s540 + $0x8] sm:$0xf]
        %v638 = vld [vmem:[%s540 + $0xc] sm:$0xf]
        %v639 = vld [vmem:[%s540 + $0x10] sm:$0xf]
        %v640 = vld [vmem:[%s540 + $0x14] sm:$0xf]
        %v641 = vld [vmem:[%s540 + $0x18] sm:$0xf]
        %v642 = vld [vmem:[%s540 + $0x1c] sm:$0xf]
        %v645 = vunpack.c.l.b16 %v633
        %v646 = vunpack.c.l.b16 %v634
        %v647 = vpack.c.b16 %v646, %v645
        %v656 = vunpack.c.l.b16 %v635
        %v657 = vunpack.c.l.b16 %v636
        %v658 = vunpack.c.l.b16 %v637
        %v659 = vunpack.c.l.b16 %v638
        %v660 = vunpack.c.l.b16 %v639
        %v661 = vunpack.c.l.b16 %v640
        %v662 = vunpack.c.l.b16 %v641
        %v663 = vunpack.c.l.b16 %v642
        %v664 = vpack.c.b16 %v657, %v656
        %v665 = vpack.c.b16 %v659, %v658
        %v666 = vpack.c.b16 %v661, %v660
        %v667 = vpack.c.b16 %v663, %v662
        %vm672 = vcmask 523264
        %v674 = vsel %vm672, %v647, 0
        %676 = vmatpush.bf16.msra.mxu0 0
        %677 = vmatpush.bf16.msra.mxu0 0
        %678 = vmatpush.bf16.msra.mxu0 0
        %679 = vmatpush.bf16.msra.mxu0 0
        %680 = vmatpush.bf16.msra.mxu0 %v667
        %681 = vmatpush.bf16.msra.mxu0 %v666
        %682 = vmatpush.bf16.msra.mxu0 %v665
        %683 = vmatpush.bf16.msra.mxu0 %v664
        %684 = vmatmul.bf16.gmra.mxu0 %v674
        %v685 = vpop.f32.mrf.mxu0
        %v686 = vadd.f32 0.0, %v685
        %v687 = vpop.f32.mrf.mxu0
        %v688 = vadd.f32 0.0, %v687
        %689 = vdwg.mxu0
        %v690 = vld [vmem:[%s545] sm:$0xf]
        %v691 = vld [vmem:[%s545 + $0x4] sm:$0xf]
        %v692 = vld [vmem:[%s545 + $0x8] sm:$0xf]
        %v693 = vld [vmem:[%s545 + $0xc] sm:$0xf]
        %v694 = vld [vmem:[%s545 + $0x10] sm:$0xf]
        %v695 = vld [vmem:[%s545 + $0x14] sm:$0xf]
        %v696 = vld [vmem:[%s545 + $0x18] sm:$0xf]
        %v697 = vld [vmem:[%s545 + $0x1c] sm:$0xf]
        %v706 = vunpack.c.l.b16 %v690
        %v707 = vunpack.c.l.b16 %v691
        %v708 = vunpack.c.l.b16 %v692
        %v709 = vunpack.c.l.b16 %v693
        %v710 = vunpack.c.l.b16 %v694
        %v711 = vunpack.c.l.b16 %v695
        %v712 = vunpack.c.l.b16 %v696
        %v713 = vunpack.c.l.b16 %v697
        %v714 = vpack.c.b16 %v707, %v706
        %v715 = vpack.c.b16 %v709, %v708
        %v716 = vpack.c.b16 %v711, %v710
        %v717 = vpack.c.b16 %v713, %v712
        %722 = vmatpush.bf16.msra.mxu0 0
        %723 = vmatpush.bf16.msra.mxu0 0
        %724 = vmatpush.bf16.msra.mxu0 0
        %725 = vmatpush.bf16.msra.mxu0 0
        %726 = vmatpush.bf16.msra.mxu0 %v717
        %727 = vmatpush.bf16.msra.mxu0 %v716
        %728 = vmatpush.bf16.msra.mxu0 %v715
        %729 = vmatpush.bf16.msra.mxu0 %v714
        %730 = vmatmul.bf16.gmra.mxu0 %v674
        %v731 = vpop.f32.mrf.mxu0
        %v732 = vadd.f32 0.0, %v731
        %v733 = vpop.f32.mrf.mxu0
        %v734 = vadd.f32 0.0, %v733
        %735 = vdwg.mxu0
        %v736 = vld [vmem:[%s550] sm:$0xf]
        %v737 = vld [vmem:[%s550 + $0x4] sm:$0xf]
        %v738 = vld [vmem:[%s550 + $0x8] sm:$0xf]
        %v739 = vld [vmem:[%s550 + $0xc] sm:$0xf]
        %v740 = vld [vmem:[%s550 + $0x10] sm:$0xf]
        %v741 = vld [vmem:[%s550 + $0x14] sm:$0xf]
        %v742 = vld [vmem:[%s550 + $0x18] sm:$0xf]
        %v743 = vld [vmem:[%s550 + $0x1c] sm:$0xf]
        %v752 = vunpack.c.l.b16 %v736
        %v753 = vunpack.c.l.b16 %v737
        %v754 = vunpack.c.l.b16 %v738
        %v755 = vunpack.c.l.b16 %v739
        %v756 = vunpack.c.l.b16 %v740
        %v757 = vunpack.c.l.b16 %v741
        %v758 = vunpack.c.l.b16 %v742
        %v759 = vunpack.c.l.b16 %v743
        %v760 = vpack.c.b16 %v753, %v752
        %v761 = vpack.c.b16 %v755, %v754
        %v762 = vpack.c.b16 %v757, %v756
        %v763 = vpack.c.b16 %v759, %v758
        %768 = vmatpush.bf16.msra.mxu0 0
        %769 = vmatpush.bf16.msra.mxu0 0
        %770 = vmatpush.bf16.msra.mxu0 0
        %771 = vmatpush.bf16.msra.mxu0 0
        %772 = vmatpush.bf16.msra.mxu0 %v763
        %773 = vmatpush.bf16.msra.mxu0 %v762
        %774 = vmatpush.bf16.msra.mxu0 %v761
        %775 = vmatpush.bf16.msra.mxu0 %v760
        %776 = vmatmul.bf16.gmra.mxu0 %v674
        %v777 = vpop.f32.mrf.mxu0
        %v778 = vadd.f32 0.0, %v777
        %v779 = vpop.f32.mrf.mxu0
        %v780 = vadd.f32 0.0, %v779
        %781 = vdwg.mxu0
        %v782 = vpack.c.bf16 %v688, %v686
        %v783 = vpack.c.bf16 %v734, %v732
        %vm784 = vcmask 64512
        %v786 = vsel %vm784, %v782, 0
        %v789 = vsel %vm784, %v783, 0
        %791 = vmatpush.bf16.xpose.msra.mxu0 0
        %792 = vmatpush.bf16.xpose.msra.mxu0 0
        %793 = vmatpush.bf16.xpose.msra.mxu0 0
        %794 = vmatpush.bf16.xpose.msra.mxu0 0
        %795 = vmatpush.bf16.xpose.msra.mxu0 0
        %796 = vmatpush.bf16.xpose.msra.mxu0 0
        %797 = vmatpush.bf16.xpose.msra.mxu0 0
        %798 = vmatpush.bf16.xpose.msra.mxu0 %v789
        %799 = vmatmul.bf16.gmra.mxu0 %v786
        %v800 = vpop.f32.mrf.mxu0
        %v801 = vadd.f32 0.0, %v800
        %v802 = vpop.f32.mrf.mxu0
        %v803 = vadd.f32 0.0, %v802
        %804 = vdwg.mxu0
        %vm805 = vcmask 130048
        %v806 = vsel %vm805, %v801, -inf
        %807 = vmax.xlane.f32.xlu0 %v806
        %v808 = vpop.xlane.xlu0 %807
        %v809 = vsel %vm805, %v803, -inf
        %810 = vmax.xlane.f32.xlu0 %v809
        %v811 = vpop.xlane.xlu0 %810
        %v812 = vsub.f32 %v801, %v808
        %v813 = vsub.f32 %v803, %v811
        %v814 = vmul.f32 %v812, 1.442695
        %v815 = vpow.pop %v814
        %v816 = vmul.f32 %v813, 1.442695
        %v817 = vpow.pop %v816
        %v818 = vsel %vm805, %v815, 0.0
        %819 = vadd.xlane.f32.xlu0 %v818
        %v820 = vpop.xlane.xlu0 %819
        %v821 = vsel %vm805, %v817, 0.0
        %822 = vadd.xlane.f32.xlu0 %v821
        %v823 = vpop.xlane.xlu0 %822
        %v824 = vrcp.pop %v820
        %v825 = vrcp.pop %v823
        %v826 = vmul.f32 %v815, %v824
        %v827 = vmul.f32 %v817, %v825
        %v828 = vpack.c.bf16 %v827, %v826
        %v829 = vpack.c.bf16 %v780, %v778
        %v831 = vsel %vm805, %v828, 0
        %833 = vmatpush.bf16.msra.mxu0 0
        %834 = vmatpush.bf16.msra.mxu0 0
        %835 = vmatpush.bf16.msra.mxu0 0
        %836 = vmatpush.bf16.msra.mxu0 0
        %837 = vmatpush.bf16.msra.mxu0 0
        %838 = vmatpush.bf16.msra.mxu0 0
        %839 = vmatpush.bf16.msra.mxu0 0
        %840 = vmatpush.bf16.msra.mxu0 %v829
        %841 = vmatmul.bf16.gmra.mxu0 %v831
        %v842 = vpop.f32.mrf.mxu0
        %v843 = vadd.f32 0.0, %v842
        %v844 = vpop.f32.mrf.mxu0
        %v845 = vadd.f32 0.0, %v844
        %846 = vdwg.mxu0
        %v847 = vld [vmem:[#allocation3] sm:$0xff]
        %v848 = vld [vmem:[#allocation3 + $0x8] sm:$0xff]
        %v849 = vpack.c.bf16 %v845, %v843
        %v850 = vld [vmem:[%s554] sm:$0xf]
        %v852 = vsel %vm784, %v849, 0
        %vm854 = vcmask 1043456
        %v856 = vsel %vm854, %v850, 0
        %858 = vmatpush.bf16.msra.mxu0 0
        %859 = vmatpush.bf16.msra.mxu0 0
        %860 = vmatpush.bf16.msra.mxu0 0
        %861 = vmatpush.bf16.msra.mxu0 0
        %862 = vmatpush.bf16.msra.mxu0 0
        %863 = vmatpush.bf16.msra.mxu0 0
        %864 = vmatpush.bf16.msra.mxu0 0
        %865 = vmatpush.bf16.msra.mxu0 %v856
        %866 = vmatmul.bf16.gmra.mxu0 %v852
        %v867 = vpop.f32.mrf.mxu0
        %v868 = vadd.f32 0.0, %v867
        %v869 = vpop.f32.mrf.mxu0
        %v870 = vadd.f32 0.0, %v869
        %871 = vdwg.mxu0
        %v872 = vadd.f32 %v847, %v868
        %v873 = vadd.f32 %v848, %v870
        %874 = vst.msk [vmem:[#allocation3] sm:$0xff] %vm672, %v872
        %875 = vst.msk [vmem:[#allocation3 + $0x8] sm:$0xff] %vm672, %v873
        %p876 = scmp.eq.s32.totalorder %s33, 7
        // Predicated region
        $region81: #{tpu_custom_call.1} parent=75 // pred_check
          %p877 = pneg %p876
        $region82: #{tpu_custom_call.1} parent=75 // pred_check_branch
          %879 = sbr.rel (%p877) target = $region84
        $region83: #{tpu_custom_call.1} parent=75 // pred_region
          %v880 = vld [vmem:[#allocation3] sm:$0xff]
          %v881 = vld [vmem:[#allocation3 + $0x8] sm:$0xff]
          %v882 = vld [vmem:[%s7] sm:$0x1]
          %v884 = vperm.slane %v882, 0
          %v886 = vadd.f32 %v880, %v884
          %v887 = vadd.f32 %v881, %v884
          %v888 = vld [vmem:[%s8] sm:$0x1]
          %v889 = vld [vmem:[%s9] sm:$0x1]
          %v890 = vsel %vm672, %v886, 0.0
          %891 = vadd.xlane.f32.xlu0 %v890
          %v892 = vpop.xlane.xlu0 %891
          %v893 = vsel %vm672, %v887, 0.0
          %894 = vadd.xlane.f32.xlu0 %v893
          %v895 = vpop.xlane.xlu0 %894
          %v896 = vrcp.pop 64.0
          %v897 = vmul.f32 64.0, %v896
          %v898 = vsub.f32 1.0, %v897
          %v899 = vmul.f32 %v896, %v898
          %v900 = vadd.f32 %v896, %v899
          %vm901 = vweird.f32 %v896
          %v902 = vsel %vm901, %v896, %v900
          %v903 = vmul.f32 %v892, %v902
          %v904 = vmul.f32 %v895, %v902
          %v905 = vsub.f32 %v886, %v903
          %v906 = vsub.f32 %v887, %v904
          %v907 = vmul.f32 %v905, %v905
          %v908 = vmul.f32 %v906, %v906
          %v909 = vsel %vm672, %v907, 0.0
          %910 = vadd.xlane.f32.xlu0 %v909
          %v911 = vpop.xlane.xlu0 %910
          %v912 = vsel %vm672, %v908, 0.0
          %913 = vadd.xlane.f32.xlu0 %v912
          %v914 = vpop.xlane.xlu0 %913
          %v915 = vmul.f32 %v911, %v902
          %v916 = vmul.f32 %v914, %v902
          %v917 = vadd.f32 %v915, 1e-05
          %v918 = vadd.f32 %v916, 1e-05
          %v919 = vrsqrt.pop %v917
          %v920 = vmul.f32 %v919, %v917
          %v921 = vmul.f32 %v920, %v919
          %v922 = vmul.f32 0.5, %v921
          %v923 = vsub.f32 1.5, %v922
          %v924 = vmul.f32 %v919, %v923
          %vm925 = vweird.f32 %v917
          %vm926 = vweird.f32 %v919
          %vm927 = vmor %vm925, %vm926
          %v928 = vsel %vm927, %v919, %v924
          %v929 = vrsqrt.pop %v918
          %v930 = vmul.f32 %v929, %v918
          %v931 = vmul.f32 %v930, %v929
          %v932 = vmul.f32 0.5, %v931
          %v933 = vsub.f32 1.5, %v932
          %v934 = vmul.f32 %v929, %v933
          %vm935 = vweird.f32 %v918
          %vm936 = vweird.f32 %v929
          %vm937 = vmor %vm935, %vm936
          %v938 = vsel %vm937, %v929, %v934
          %v939 = vmul.f32 %v905, %v928
          %v940 = vmul.f32 %v906, %v938
          %v942 = vperm.slane %v888, 0
          %v944 = vmul.f32 %v939, %v942
          %v945 = vmul.f32 %v940, %v942
          %v947 = vperm.slane %v889, 0
          %v949 = vadd.f32 %v944, %v947
          %v950 = vadd.f32 %v945, %v947
          %v951 = vpack.c.bf16 %v950, %v949
          %v952 = vld [vmem:[%s10] sm:$0xff]
          %v953 = vld [vmem:[%s10 + $0x8] sm:$0xff]
          %v954 = vld [vmem:[%s10 + $0x10] sm:$0xff]
          %v955 = vld [vmem:[%s10 + $0x18] sm:$0xff]
          %v956 = vld [vmem:[%s10 + $0x20] sm:$0xff]
          %v957 = vld [vmem:[%s10 + $0x28] sm:$0xff]
          %v958 = vld [vmem:[%s10 + $0x30] sm:$0xff]
          %v959 = vld [vmem:[%s10 + $0x38] sm:$0xff]
          %v960 = vld [vmem:[%s11] sm:$0x3]
          %v962 = vperm.slane %v960, 0
          %v963 = vperm.slane %v960, 1
          %v974 = vunpack.c.l.b16 %v952
          %v975 = vunpack.c.h.b16 %v952
          %v976 = vunpack.c.l.b16 %v953
          %v977 = vunpack.c.h.b16 %v953
          %v978 = vunpack.c.l.b16 %v954
          %v979 = vunpack.c.h.b16 %v954
          %v980 = vunpack.c.l.b16 %v955
          %v981 = vunpack.c.h.b16 %v955
          %v982 = vunpack.c.l.b16 %v956
          %v983 = vunpack.c.h.b16 %v956
          %v984 = vunpack.c.l.b16 %v957
          %v985 = vunpack.c.h.b16 %v957
          %v986 = vunpack.c.l.b16 %v958
          %v987 = vunpack.c.h.b16 %v958
          %v988 = vunpack.c.l.b16 %v959
          %v989 = vunpack.c.h.b16 %v959
          %v990 = vpack.c.b16 %v976, %v974
          %v991 = vpack.c.b16 %v977, %v975
          %v992 = vpack.c.b16 %v980, %v978
          %v993 = vpack.c.b16 %v981, %v979
          %v994 = vpack.c.b16 %v984, %v982
          %v995 = vpack.c.b16 %v985, %v983
          %v996 = vpack.c.b16 %v988, %v986
          %v997 = vpack.c.b16 %v989, %v987
          %v1007 = vsel %vm672, %v951, 0
          %1009 = vmatpush.bf16.msra.mxu0 0
          %1010 = vmatpush.bf16.msra.mxu0 0
          %1011 = vmatpush.bf16.msra.mxu0 0
          %1012 = vmatpush.bf16.msra.mxu0 0
          %1013 = vmatpush.bf16.msra.mxu0 %v996
          %1014 = vmatpush.bf16.msra.mxu0 %v994
          %1015 = vmatpush.bf16.msra.mxu0 %v992
          %1016 = vmatpush.bf16.msra.mxu0 %v990
          %1017 = vmatmul.bf16.gmra.mxu0 %v1007
          %v1018 = vpop.f32.mrf.mxu0
          %v1019 = vadd.f32 %v962, %v1018
          %v1020 = vpop.f32.mrf.mxu0
          %v1021 = vadd.f32 %v962, %v1020
          %1022 = vdwg.mxu0
          %1023 = vmatpush.bf16.msra.mxu0 0
          %1024 = vmatpush.bf16.msra.mxu0 0
          %1025 = vmatpush.bf16.msra.mxu0 0
          %1026 = vmatpush.bf16.msra.mxu0 0
          %1027 = vmatpush.bf16.msra.mxu0 %v997
          %1028 = vmatpush.bf16.msra.mxu0 %v995
          %1029 = vmatpush.bf16.msra.mxu0 %v993
          %1030 = vmatpush.bf16.msra.mxu0 %v991
          %1031 = vmatmul.bf16.gmra.mxu0 %v1007
          %v1032 = vpop.f32.mrf.mxu0
          %v1033 = vadd.f32 %v963, %v1032
          %v1034 = vpop.f32.mrf.mxu0
          %v1035 = vadd.f32 %v963, %v1034
          %1036 = vdwg.mxu0
          %v1037 = vmul.f32 %v1019, 0.5
          %v1038 = vmul.f32 %v1033, 0.5
          %v1039 = vmul.f32 %v1021, 0.5
          %v1040 = vmul.f32 %v1035, 0.5
          %v1041 = vmul.f32 %v1019, 0.044715
          %v1042 = vmul.f32 %v1033, 0.044715
          %v1043 = vmul.f32 %v1021, 0.044715
          %v1044 = vmul.f32 %v1035, 0.044715
          %v1045 = vmul.f32 %v1041, %v1019
          %v1046 = vmul.f32 %v1042, %v1033
          %v1047 = vmul.f32 %v1043, %v1021
          %v1048 = vmul.f32 %v1044, %v1035
          %v1049 = vmul.f32 %v1045, %v1019
          %v1050 = vmul.f32 %v1046, %v1033
          %v1051 = vmul.f32 %v1047, %v1021
          %v1052 = vmul.f32 %v1048, %v1035
          %v1053 = vadd.f32 %v1019, %v1049
          %v1054 = vadd.f32 %v1033, %v1050
          %v1055 = vadd.f32 %v1021, %v1051
          %v1056 = vadd.f32 %v1035, %v1052
          %v1057 = vmul.f32 %v1053, 0.7978846
          %v1058 = vmul.f32 %v1054, 0.7978846
          %v1059 = vmul.f32 %v1055, 0.7978846
          %v1060 = vmul.f32 %v1056, 0.7978846
          %v1061 = vtanh.pop %v1057
          %v1062 = vtanh.pop %v1058
          %v1063 = vtanh.pop %v1059
          %v1064 = vtanh.pop %v1060
          %v1065 = vadd.f32 %v1061, 1.0
          %v1066 = vadd.f32 %v1062, 1.0
          %v1067 = vadd.f32 %v1063, 1.0
          %v1068 = vadd.f32 %v1064, 1.0
          %v1069 = vmul.f32 %v1037, %v1065
          %v1070 = vmul.f32 %v1038, %v1066
          %v1071 = vmul.f32 %v1039, %v1067
          %v1072 = vmul.f32 %v1040, %v1068
          %v1073 = vpack.c.bf16 %v1071, %v1069
          %v1074 = vpack.c.bf16 %v1072, %v1070
          %v1075 = vld [vmem:[%s12] sm:$0xf]
          %v1076 = vld [vmem:[%s12 + $0x4] sm:$0xf]
          %v1077 = vld [vmem:[%s12 + $0x8] sm:$0xf]
          %v1078 = vld [vmem:[%s12 + $0xc] sm:$0xf]
          %v1079 = vld [vmem:[%s12 + $0x10] sm:$0xf]
          %v1080 = vld [vmem:[%s12 + $0x14] sm:$0xf]
          %v1081 = vld [vmem:[%s12 + $0x18] sm:$0xf]
          %v1082 = vld [vmem:[%s12 + $0x1c] sm:$0xf]
          %v1083 = vld [vmem:[%s12 + $0x20] sm:$0xf]
          %v1084 = vld [vmem:[%s12 + $0x24] sm:$0xf]
          %v1085 = vld [vmem:[%s12 + $0x28] sm:$0xf]
          %v1086 = vld [vmem:[%s12 + $0x2c] sm:$0xf]
          %v1087 = vld [vmem:[%s12 + $0x30] sm:$0xf]
          %v1088 = vld [vmem:[%s12 + $0x34] sm:$0xf]
          %v1089 = vld [vmem:[%s12 + $0x38] sm:$0xf]
          %v1090 = vld [vmem:[%s12 + $0x3c] sm:$0xf]
          %v1091 = vld [vmem:[%s12 + $0x40] sm:$0xf]
          %v1092 = vld [vmem:[%s12 + $0x44] sm:$0xf]
          %v1093 = vld [vmem:[%s12 + $0x48] sm:$0xf]
          %v1094 = vld [vmem:[%s12 + $0x4c] sm:$0xf]
          %v1095 = vld [vmem:[%s12 + $0x50] sm:$0xf]
          %v1096 = vld [vmem:[%s12 + $0x54] sm:$0xf]
          %v1097 = vld [vmem:[%s12 + $0x58] sm:$0xf]
          %v1098 = vld [vmem:[%s12 + $0x5c] sm:$0xf]
          %v1099 = vld [vmem:[%s12 + $0x60] sm:$0xf]
          %v1100 = vld [vmem:[%s12 + $0x64] sm:$0xf]
          %v1101 = vld [vmem:[%s12 + $0x68] sm:$0xf]
          %v1102 = vld [vmem:[%s12 + $0x6c] sm:$0xf]
          %v1103 = vld [vmem:[%s12 + $0x70] sm:$0xf]
          %v1104 = vld [vmem:[%s12 + $0x74] sm:$0xf]
          %v1105 = vld [vmem:[%s12 + $0x78] sm:$0xf]
          %v1106 = vld [vmem:[%s12 + $0x7c] sm:$0xf]
          %v1107 = vld [vmem:[%s13] sm:$0x1]
          %v1109 = vperm.slane %v1107, 0
          %v1143 = vunpack.c.l.b16 %v1075
          %v1144 = vunpack.c.l.b16 %v1076
          %v1145 = vunpack.c.l.b16 %v1077
          %v1146 = vunpack.c.l.b16 %v1078
          %v1147 = vunpack.c.l.b16 %v1079
          %v1148 = vunpack.c.l.b16 %v1080
          %v1149 = vunpack.c.l.b16 %v1081
          %v1150 = vunpack.c.l.b16 %v1082
          %v1151 = vunpack.c.l.b16 %v1083
          %v1152 = vunpack.c.l.b16 %v1084
          %v1153 = vunpack.c.l.b16 %v1085
          %v1154 = vunpack.c.l.b16 %v1086
          %v1155 = vunpack.c.l.b16 %v1087
          %v1156 = vunpack.c.l.b16 %v1088
          %v1157 = vunpack.c.l.b16 %v1089
          %v1158 = vunpack.c.l.b16 %v1090
          %v1159 = vunpack.c.l.b16 %v1091
          %v1160 = vunpack.c.l.b16 %v1092
          %v1161 = vunpack.c.l.b16 %v1093
          %v1162 = vunpack.c.l.b16 %v1094
          %v1163 = vunpack.c.l.b16 %v1095
          %v1164 = vunpack.c.l.b16 %v1096
          %v1165 = vunpack.c.l.b16 %v1097
          %v1166 = vunpack.c.l.b16 %v1098
          %v1167 = vunpack.c.l.b16 %v1099
          %v1168 = vunpack.c.l.b16 %v1100
          %v1169 = vunpack.c.l.b16 %v1101
          %v1170 = vunpack.c.l.b16 %v1102
          %v1171 = vunpack.c.l.b16 %v1103
          %v1172 = vunpack.c.l.b16 %v1104
          %v1173 = vunpack.c.l.b16 %v1105
          %v1174 = vunpack.c.l.b16 %v1106
          %v1175 = vpack.c.b16 %v1144, %v1143
          %v1176 = vpack.c.b16 %v1146, %v1145
          %v1177 = vpack.c.b16 %v1148, %v1147
          %v1178 = vpack.c.b16 %v1150, %v1149
          %v1179 = vpack.c.b16 %v1152, %v1151
          %v1180 = vpack.c.b16 %v1154, %v1153
          %v1181 = vpack.c.b16 %v1156, %v1155
          %v1182 = vpack.c.b16 %v1158, %v1157
          %v1183 = vpack.c.b16 %v1160, %v1159
          %v1184 = vpack.c.b16 %v1162, %v1161
          %v1185 = vpack.c.b16 %v1164, %v1163
          %v1186 = vpack.c.b16 %v1166, %v1165
          %v1187 = vpack.c.b16 %v1168, %v1167
          %v1188 = vpack.c.b16 %v1170, %v1169
          %v1189 = vpack.c.b16 %v1172, %v1171
          %v1190 = vpack.c.b16 %v1174, %v1173
          %1207 = vmatpush.bf16.msra.mxu0 %v1182
          %1208 = vmatpush.bf16.msra.mxu0 %v1181
          %1209 = vmatpush.bf16.msra.mxu0 %v1180
          %1210 = vmatpush.bf16.msra.mxu0 %v1179
          %1211 = vmatpush.bf16.msra.mxu0 %v1178
          %1212 = vmatpush.bf16.msra.mxu0 %v1177
          %1213 = vmatpush.bf16.msra.mxu0 %v1176
          %1214 = vmatpush.bf16.msra.mxu0 %v1175
          %1215 = vmatmul.bf16.gmra.mxu0 %v1073
          %v1216 = vpop.f32.mrf.mxu0
          %v1217 = vadd.f32 %v1109, %v1216
          %v1218 = vpop.f32.mrf.mxu0
          %v1219 = vadd.f32 %v1109, %v1218
          %1220 = vdwg.mxu0
          %1221 = vmatpush.bf16.msra.mxu0 %v1190
          %1222 = vmatpush.bf16.msra.mxu0 %v1189
          %1223 = vmatpush.bf16.msra.mxu0 %v1188
          %1224 = vmatpush.bf16.msra.mxu0 %v1187
          %1225 = vmatpush.bf16.msra.mxu0 %v1186
          %1226 = vmatpush.bf16.msra.mxu0 %v1185
          %1227 = vmatpush.bf16.msra.mxu0 %v1184
          %1228 = vmatpush.bf16.msra.mxu0 %v1183
          %1229 = vmatmul.bf16.gmra.mxu0 %v1074
          %v1230 = vpop.f32.mrf.mxu0
          %v1231 = vadd.f32 %v1217, %v1230
          %v1232 = vpop.f32.mrf.mxu0
          %v1233 = vadd.f32 %v1219, %v1232
          %1234 = vdwg.mxu0
          %v1235 = vadd.f32 %v886, %v1231
          %v1236 = vadd.f32 %v887, %v1233
          %1237 = vst.msk [vmem:[%s530] sm:$0xff] %vm672, %v1235
          %1238 = vst.msk [vmem:[%s530 + $0x8] sm:$0xff] %vm672, %v1236
        $region84: #{tpu_custom_call.1} parent=75 // pred_fallthru
          _
        %s1239 = sand.u32 %s367, 1
        %s1240 = scalar_lea.sflag [#allocation5], %s1239
        %s1241 = sand.u32 %s367, 1
        %s1242 = smul.addr %s1241, 16
        %s1243 = scalar_lea.vmem [#allocation4], %s1242
        // Predicated region
        $region85: #{tpu_custom_call.1} parent=75 // pred_check
          %p1244 = pneg %p377
        $region86: #{tpu_custom_call.1} parent=75 // pred_check_branch
          %1246 = sbr.rel (%p1244) target = $region88
        $region87: #{tpu_custom_call.1} parent=75 // pred_region
          %1248 = vsyncadd %s1240, 0
          %s1249 = smul.addr %s32, 2
          %s1250 = smul.addr %s1249, 8
          %s1251 = scalar_lea.hbm %s14, %s1250
          %s1252 = sshll.u32 %s1243, 4
          %s1253 = int_to_ptr.vmem [resolvable:$true] %s1252
          %s1254 = sshll.u32 %s1251, 4
          %s1255 = int_to_ptr.hbm [resolvable:$true] %s1254
          %1260 = dma.vmem_to_hbm [thread:$0]  %s1253, 256, %s1255, %s1240, 128, 128, 8
        $region88: #{tpu_custom_call.1} parent=75 // pred_fallthru
          _
      $region76: #{tpu_custom_call.1} parent=5 // pred_fallthru
        _
      %p1261 = scmp.le.s32.totalorder 2, %s23
      // Predicated region
      $region89: #{tpu_custom_call.1} parent=5 // pred_check
        %p1262 = pneg %p1261
      $region90: #{tpu_custom_call.1} parent=5 // pred_check_branch
        %1264 = sbr.rel (%p1262) target = $region92
      $region91: #{tpu_custom_call.1} parent=5 // pred_region
        %s1265 = ssub.s32 %s23, 2
        // Predicated region
        $region93: #{tpu_custom_call.1} parent=91 // pred_check
          %p1266 = pneg %p383
        $region94: #{tpu_custom_call.1} parent=91 // pred_check_branch
          %1268 = sbr.rel (%p1266) target = $region96
        $region95: #{tpu_custom_call.1} parent=91 // pred_region
          %s1269 = sand.u32 %s368, 1
          %s1270 = scalar_lea.sflag [#allocation5], %s1269
          %s1271 = sand.u32 %s368, 1
          %s1272 = smul.addr %s1271, 16
          %s1273 = scalar_lea.vmem [#allocation4], %s1272
          %1275 = dma.done %s1270, 256
        $region96: #{tpu_custom_call.1} parent=91 // pred_fallthru
          _
      $region92: #{tpu_custom_call.1} parent=5 // pred_fallthru
        _
    $region6: #{tpu_custom_call.1} parent=1 // loop_footer
      %s27 = sadd.s32 1, %s23
    $region7: #{tpu_custom_call.1} parent=1 // loop_footer_branch
      %22 = sbr.rel target = $region3
    $region8: #{tpu_custom_call.1} parent=1 // loop_exit
      _
    %1276 = vsyncpa [#allocation5], 1
    %s1277 = scalar_lea.sflag [#allocation5], 1
    %1278 = vsyncpa %s1277, 1

</llo_original>
